<compile_context>
chip_gen: v7x
topology: tpu7x:2x2x1
jax: 0.10.0
libtpu: 0.0.40
codegen_flags: <defaults>
</compile_context>

<pallas_src>
import functools

import jax
import jax.numpy as jnp
from jax.experimental import pallas as pl
from jax.experimental.pallas import tpu as pltpu


def _imha_kernel(q_ref, k_ref, v_ref,
                 gamma_ref, beta_ref,
                 wf_ref, bf_ref,
                 wo_ref, bo_ref,
                 *out_refs,
                 return_attention: bool):
    out_ref = out_refs[0]
    attn_ref = out_refs[1] if return_attention else None

    bb, Tq, H = q_ref.shape
    Tk = k_ref.shape[1]
    nH = (wf_ref.shape[1] - H) // 2
    nq = bb * Tq
    nk = bb * Tk

    q = q_ref[...]                       # (bb, Tq, H)
    k = k_ref[...]                       # (bb, Tk, H)
    v = v_ref[...]                       # (bb, Tk, H)

    # ---- shared LayerNorm (eps=1e-5) on all q|k|v rows in one pass ------------------
    x = jnp.concatenate([q.reshape(nq, H), k.reshape(nk, H), v.reshape(nk, H)], axis=0)
    mean = jnp.mean(x, axis=-1, keepdims=True)
    var = jnp.mean((x - mean) ** 2, axis=-1, keepdims=True)
    xn = (x - mean) * jax.lax.rsqrt(var + 1e-5) * gamma_ref[...] + beta_ref[...]

    # ---- single fused projection: columns = [wq | wk | wv] --------------------------
    proj = (jnp.dot(xn, wf_ref[...], preferred_element_type=jnp.float32)
            + bf_ref[...])                                   # (bb*(Tq+2Tk), 2*nH+H)

    scale = 1.0 / (float(H) ** 0.5)
    qh = (proj[:nq, :nH] * scale).reshape(bb, Tq, nH)        # softmax scale folded in once
    kh = proj[nq:nq + nk, nH:2 * nH].reshape(bb, Tk, nH)
    vp = proj[nq + nk:, 2 * nH:].reshape(bb, Tk, H)

    # ---- per-head rank-1 scores + softmax, averaged over heads ----------------------
    # TODO(synk): optional attention mask (mask==0 -> -1e9) not implemented.
    inv_nh = 1.0 / float(nH)
    avg_attn = jnp.zeros((bb, Tq, Tk), jnp.float32)
    for h in range(nH):                                      # static unroll, nH is tiny
        q_h = qh[:, :, h][:, :, None]                        # (bb, Tq, 1)
        k_h = kh[:, :, h][:, None, :]                        # (bb, 1, Tk)
        s = q_h * k_h                                        # (bb, Tq, Tk)
        s = s - jnp.max(s, axis=-1, keepdims=True)
        e = jnp.exp(s)
        r = inv_nh / jnp.sum(e, axis=-1, keepdims=True)      # cheap (bb,Tq,1) divide
        avg_attn = avg_attn + e * r                          # 1/nH folded into normalizer

    # ---- context = avg_attn @ vp ------------------------------------------------------
    if Tk <= 32:
        # small-Tk path: Tk VPU FMAs over lane-dense (bb,Tq,H) instead of bb tiny MXU calls
        ctx = avg_attn[:, :, 0:1] * vp[:, 0:1, :]
        for t in range(1, Tk):
            ctx = ctx + avg_attn[:, :, t:t + 1] * vp[:, t:t + 1, :]
    else:
        ctx = jnp.einsum('bqk,bkd->bqd', avg_attn, vp,
                         preferred_element_type=jnp.float32)

    # ---- output projection + residual (residual uses the *unnormalized* query) --------
    out = (jnp.dot(ctx.reshape(nq, H), wo_ref[...], preferred_element_type=jnp.float32)
           + bo_ref[...]).reshape(bb, Tq, H)
    # TODO(synk): dropout_layer is identity here (eval mode); training dropout would need
    #             pltpu.prng_seed + pltpu.prng_random_bits masking.
    out = out + q

    out_ref[...] = out.astype(out_ref.dtype)
    if return_attention:
        attn_ref[...] = avg_attn.astype(attn_ref.dtype)


def imha_forward(q, k, v, params, *, bb=32, mask=None, return_attention=True):
    """q: (B,Tq,H), k/v: (B,Tk,H) float32 -> (output (B,Tq,H), avg_attention (B,Tq,Tk))."""
    if mask is not None:
        raise NotImplementedError("attention mask is not supported in this kernel")

    B, Tq, H = q.shape
    Tk = k.shape[1]
    nH = params["wq"].shape[1]

    def _round_up(x, m):
        return ((x + m - 1) // m) * m

    # Batch tile: multiple of 8 (sublane aligned), large enough to fill the MXU M dim for
    # big batches, clamped so tiny batches do not over-pad.
    bb = _round_up(max(1, min(bb, _round_up(B, 8))), 8)
    Bp = _round_up(B, bb)
    if Bp != B:
        pad = Bp - B
        q = jnp.concatenate([q, jnp.zeros((pad, Tq, H), q.dtype)], axis=0)
        k = jnp.concatenate([k, jnp.zeros((pad, Tk, H), k.dtype)], axis=0)
        v = jnp.concatenate([v, jnp.zeros((pad, Tk, H), v.dtype)], axis=0)

    # Fuse the three projection weights once (outside the kernel); they stay VMEM-resident.
    w_fused = jnp.concatenate([params["wq"], params["wk"], params["wv"]], axis=1)  # (H, 2nH+H)
    b_fused = jnp.concatenate([params["bq"], params["bk"], params["bv"]], axis=1)  # (1, 2nH+H)

    full = lambda shape: pl.BlockSpec(shape, lambda i: (0,) * len(shape))

    rows = Tq + 2 * Tk
    nf = 2 * nH + H
    flops = (Bp * rows * H * 8                        # LayerNorm
             + 2 * Bp * rows * H * nf                 # fused projection
             + 4 * Bp * nH * Tq * Tk                  # scores + softmax arithmetic
             + 2 * Bp * Tq * Tk * H                   # context
             + 2 * Bp * Tq * H * H + Bp * Tq * H)     # output projection + residual
    bytes_accessed = 4 * (Bp * rows * H + Bp * Tq * H
                          + (Bp * Tq * Tk if return_attention else 0)
                          + H * nf + nf + H * H + 3 * H)
    cost = pl.CostEstimate(flops=flops,
                           transcendentals=Bp * (nH * Tq * Tk + rows),
                           bytes_accessed=bytes_accessed)

    out_shapes = [jax.ShapeDtypeStruct((Bp, Tq, H), jnp.float32)]
    out_specs = [pl.BlockSpec((bb, Tq, H), lambda i: (i, 0, 0))]
    if return_attention:
        out_shapes.append(jax.ShapeDtypeStruct((Bp, Tq, Tk), jnp.float32))
        out_specs.append(pl.BlockSpec((bb, Tq, Tk), lambda i: (i, 0, 0)))

    results = pl.pallas_call(
        functools.partial(_imha_kernel, return_attention=return_attention),
        out_shape=tuple(out_shapes),
        grid_spec=pltpu.PrefetchScalarGridSpec(
            num_scalar_prefetch=0,
            grid=(Bp // bb,),
            in_specs=[
                pl.BlockSpec((bb, Tq, H), lambda i: (i, 0, 0)),   # query
                pl.BlockSpec((bb, Tk, H), lambda i: (i, 0, 0)),   # key
                pl.BlockSpec((bb, Tk, H), lambda i: (i, 0, 0)),   # value
                full((1, H)),        # layernorm gamma
                full((1, H)),        # layernorm beta
                full((H, nf)),       # fused [wq | wk | wv]
                full((1, nf)),       # fused [bq | bk | bv]
                full((H, H)),        # wo
                full((1, H)),        # bo
            ],
            out_specs=tuple(out_specs),
        ),
        compiler_params=pltpu.CompilerParams(
            dimension_semantics=("parallel",)),
        cost_estimate=cost,
    )(q, k, v,
      params["gamma"], params["beta"],
      w_fused, b_fused,
      params["wo"], params["bo"])

    out = results[0][:B]
    if return_attention:
        return out, results[1][:B]
    return out, None


def imha_reference(q, k, v, p):
    """Pure-JAX reference mirroring the PyTorch forward (eval mode, no mask)."""
    def layer_norm(x):
        mean = jnp.mean(x, axis=-1, keepdims=True)
        var = jnp.mean((x - mean) ** 2, axis=-1, keepdims=True)
        return (x - mean) * jax.lax.rsqrt(var + 1e-5) * p["gamma"] + p["beta"]

    qn, kn, vn = layer_norm(q), layer_norm(k), layer_norm(v)
    vp = vn @ p["wv"] + p["bv"]
    H = q.shape[-1]
    nH = p["wq"].shape[1]
    attns = []
    for h in range(nH):
        qp = qn @ p["wq"][:, h:h + 1] + p["bq"][:, h:h + 1]   # (B, Tq, 1)
        kp = kn @ p["wk"][:, h:h + 1] + p["bk"][:, h:h + 1]   # (B, Tk, 1)
        scores = qp @ jnp.swapaxes(kp, 1, 2) / (H ** 0.5)     # (B, Tq, Tk)
        attns.append(jax.nn.softmax(scores, axis=-1))
    avg = jnp.mean(jnp.stack(attns), axis=0)
    ctx = avg @ vp
    out = ctx @ p["wo"] + p["bo"] + q
    return out, avg


if __name__ == "__main__":
    batch, seq, hidden, num_heads = 2, 8, 32, 4

    key = jax.random.PRNGKey(0)
    ks = jax.random.split(key, 16)

    def init(k_, shape, scale=0.1):
        return (scale * jax.random.normal(k_, shape)).astype(jnp.float32)

    # Linear weights stored as (in_features, out_features) == PyTorch W.T
    params = {
        "gamma": (1.0 + 0.1 * jax.random.normal(ks[0], (1, hidden))).astype(jnp.float32),
        "beta":  init(ks[1], (1, hidden)),
        "wq":    init(ks[2], (hidden, num_heads)),   # num_heads (H->1) heads fused
        "bq":    init(ks[3], (1, num_heads)),
        "wk":    init(ks[4], (hidden, num_heads)),
        "bk":    init(ks[5], (1, num_heads)),
        "wv":    init(ks[6], (hidden, hidden)),
        "bv":    init(ks[7], (1, hidden)),
        "wo":    init(ks[8], (hidden, hidden)),
        "bo":    init(ks[9], (1, hidden)),
    }

    q = jax.random.normal(ks[10], (batch, seq, hidden), dtype=jnp.float32)
    k = jax.random.normal(ks[11], (batch, seq, hidden), dtype=jnp.float32)
    v = jax.random.normal(ks[12], (batch, seq, hidden), dtype=jnp.float32)

    out, attn = imha_forward(q, k, v, params)
    jax.block_until_ready((out, attn))

    ref_out, ref_attn = imha_reference(q, k, v, params)
    assert out.shape == (batch, seq, hidden) and attn.shape == (batch, seq, seq)
    assert jnp.allclose(out, ref_out, atol=1e-4, rtol=1e-4), "output mismatch vs reference"
    assert jnp.allclose(attn, ref_attn, atol=1e-5, rtol=1e-4), "attention mismatch vs reference"

    # Larger, non-divisible batch: exercises padding, bb>1 tiling and a multi-step parallel grid.
    qb = jax.random.normal(ks[13], (20, seq, hidden), dtype=jnp.float32)
    kb = jax.random.normal(ks[14], (20, seq, hidden), dtype=jnp.float32)
    vb = jax.random.normal(ks[15], (20, seq, hidden), dtype=jnp.float32)
    out_b, attn_b = imha_forward(qb, kb, vb, params, bb=8)
    jax.block_until_ready((out_b, attn_b))
    ref_out_b, ref_attn_b = imha_reference(qb, kb, vb, params)
    assert jnp.allclose(out_b, ref_out_b, atol=1e-4, rtol=1e-4), "batched output mismatch"
    assert jnp.allclose(attn_b, ref_attn_b, atol=1e-5, rtol=1e-4), "batched attention mismatch"

    print("KERNEL_OK")
</pallas_src>

<mosaic_0001>
module attributes {stable_mosaic.version = 11 : i64} {
  func.func @_imha_kernel(%arg0: i32, %arg1: memref<8x8x32xf32, #tpu.memory_space<vmem>>, %arg2: memref<8x8x32xf32, #tpu.memory_space<vmem>>, %arg3: memref<8x8x32xf32, #tpu.memory_space<vmem>>, %arg4: memref<1x32xf32, #tpu.memory_space<vmem>>, %arg5: memref<1x32xf32, #tpu.memory_space<vmem>>, %arg6: memref<32x40xf32, #tpu.memory_space<vmem>>, %arg7: memref<1x40xf32, #tpu.memory_space<vmem>>, %arg8: memref<32x32xf32, #tpu.memory_space<vmem>>, %arg9: memref<1x32xf32, #tpu.memory_space<vmem>>, %arg10: memref<8x8x32xf32, #tpu.memory_space<vmem>>, %arg11: memref<8x8x8xf32, #tpu.memory_space<vmem>>) attributes {dimension_semantics = [#tpu.dimension_semantics<parallel>], iteration_bounds = array<i64: 1>, scalar_prefetch = 0 : i64, scratch_operands = 0 : i64, tpu.core_type = #tpu.core_type<tc>, window_params = [{transform_indices = @transform_0, window_bounds = array<i64: 8, 8, 32>}, {transform_indices = @transform_1, window_bounds = array<i64: 8, 8, 32>}, {transform_indices = @transform_2, window_bounds = array<i64: 8, 8, 32>}, {pipeline_mode = #tpu.pipeline_mode<synchronous>, transform_indices = @transform_3, window_bounds = array<i64: 1, 32>}, {pipeline_mode = #tpu.pipeline_mode<synchronous>, transform_indices = @transform_4, window_bounds = array<i64: 1, 32>}, {pipeline_mode = #tpu.pipeline_mode<synchronous>, transform_indices = @transform_5, window_bounds = array<i64: 32, 40>}, {pipeline_mode = #tpu.pipeline_mode<synchronous>, transform_indices = @transform_6, window_bounds = array<i64: 1, 40>}, {pipeline_mode = #tpu.pipeline_mode<synchronous>, transform_indices = @transform_7, window_bounds = array<i64: 32, 32>}, {pipeline_mode = #tpu.pipeline_mode<synchronous>, transform_indices = @transform_8, window_bounds = array<i64: 1, 32>}, {transform_indices = @transform_9, window_bounds = array<i64: 8, 8, 32>}, {transform_indices = @transform_10, window_bounds = array<i64: 8, 8, 8>}]} {
    %c0 = arith.constant 0 : index
    %c0_0 = arith.constant 0 : index
    %c0_1 = arith.constant 0 : index
    %0 = vector.load %arg1[%c0, %c0_0, %c0_1] : memref<8x8x32xf32, #tpu.memory_space<vmem>>, vector<8x8x32xf32>
    %c0_2 = arith.constant 0 : index
    %c0_3 = arith.constant 0 : index
    %c0_4 = arith.constant 0 : index
    %1 = vector.load %arg2[%c0_2, %c0_3, %c0_4] : memref<8x8x32xf32, #tpu.memory_space<vmem>>, vector<8x8x32xf32>
    %c0_5 = arith.constant 0 : index
    %c0_6 = arith.constant 0 : index
    %c0_7 = arith.constant 0 : index
    %2 = vector.load %arg3[%c0_5, %c0_6, %c0_7] : memref<8x8x32xf32, #tpu.memory_space<vmem>>, vector<8x8x32xf32>
    %3 = vector.shape_cast %0 : vector<8x8x32xf32> to vector<64x32xf32>
    %4 = vector.shape_cast %1 : vector<8x8x32xf32> to vector<64x32xf32>
    %5 = vector.shape_cast %2 : vector<8x8x32xf32> to vector<64x32xf32>
    %6 = tpu.concatenate %3, %4, %5 in 0 : vector<64x32xf32>, vector<64x32xf32>, vector<64x32xf32> -> vector<192x32xf32>
    %cst = arith.constant dense<0.000000e+00> : vector<192xf32>
    %7 = vector.multi_reduction <add>, %6, %cst [1] : vector<192x32xf32> to vector<192xf32>
    %8 = vector.shape_cast %7 : vector<192xf32> to vector<192x1xf32>
    %cst_8 = arith.constant 3.200000e+01 : f32
    %9 = vector.broadcast %cst_8 : f32 to vector<192x1xf32>
    %10 = arith.divf %8, %9 : vector<192x1xf32>
    %11 = vector.broadcast %10 : vector<192x1xf32> to vector<192x32xf32>
    %12 = arith.subf %6, %11 : vector<192x32xf32>
    %13 = arith.mulf %12, %12 : vector<192x32xf32>
    %cst_9 = arith.constant dense<0.000000e+00> : vector<192xf32>
    %14 = vector.multi_reduction <add>, %13, %cst_9 [1] : vector<192x32xf32> to vector<192xf32>
    %15 = vector.shape_cast %14 : vector<192xf32> to vector<192x1xf32>
    %cst_10 = arith.constant 3.200000e+01 : f32
    %16 = vector.broadcast %cst_10 : f32 to vector<192x1xf32>
    %17 = arith.divf %15, %16 : vector<192x1xf32>
    %18 = vector.broadcast %10 : vector<192x1xf32> to vector<192x32xf32>
    %19 = arith.subf %6, %18 : vector<192x32xf32>
    %cst_11 = arith.constant 9.99999974E-6 : f32
    %20 = vector.broadcast %cst_11 : f32 to vector<192x1xf32>
    %21 = arith.addf %17, %20 : vector<192x1xf32>
    %22 = math.rsqrt %21 : vector<192x1xf32>
    %23 = vector.broadcast %22 : vector<192x1xf32> to vector<192x32xf32>
    %24 = arith.mulf %19, %23 : vector<192x32xf32>
    %c0_12 = arith.constant 0 : index
    %c0_13 = arith.constant 0 : index
    %25 = vector.load %arg4[%c0_12, %c0_13] : memref<1x32xf32, #tpu.memory_space<vmem>>, vector<1x32xf32>
    %26 = vector.broadcast %25 : vector<1x32xf32> to vector<192x32xf32>
    %27 = arith.mulf %24, %26 : vector<192x32xf32>
    %c0_14 = arith.constant 0 : index
    %c0_15 = arith.constant 0 : index
    %28 = vector.load %arg5[%c0_14, %c0_15] : memref<1x32xf32, #tpu.memory_space<vmem>>, vector<1x32xf32>
    %29 = vector.broadcast %28 : vector<1x32xf32> to vector<192x32xf32>
    %30 = arith.addf %27, %29 : vector<192x32xf32>
    %c0_16 = arith.constant 0 : index
    %c0_17 = arith.constant 0 : index
    %31 = vector.load %arg6[%c0_16, %c0_17] : memref<32x40xf32, #tpu.memory_space<vmem>>, vector<32x40xf32>
    %cst_18 = arith.constant dense<0.000000e+00> : vector<192x40xf32>
    %32 = tpu.matmul %30, %31, %cst_18 {dimension_numbers = #tpu.dot_dimension_numbers<[1], [0], [0], [1], [0, 0, 1, 1], [], []>} : vector<192x32xf32>, vector<32x40xf32>, vector<192x40xf32> -> vector<192x40xf32>
    %c0_19 = arith.constant 0 : index
    %c0_20 = arith.constant 0 : index
    %33 = vector.load %arg7[%c0_19, %c0_20] : memref<1x40xf32, #tpu.memory_space<vmem>>, vector<1x40xf32>
    %34 = vector.broadcast %33 : vector<1x40xf32> to vector<192x40xf32>
    %35 = arith.addf %32, %34 : vector<192x40xf32>
    %36 = vector.extract_strided_slice %35 {offsets = [0, 0], sizes = [64, 4], strides = [1, 1]} : vector<192x40xf32> to vector<64x4xf32>
    %cst_21 = arith.constant 0.176776692 : f32
    %37 = vector.broadcast %cst_21 : f32 to vector<64x4xf32>
    %38 = arith.mulf %36, %37 : vector<64x4xf32>
    %39 = vector.shape_cast %38 : vector<64x4xf32> to vector<8x8x4xf32>
    %40 = vector.extract_strided_slice %35 {offsets = [64, 4], sizes = [64, 4], strides = [1, 1]} : vector<192x40xf32> to vector<64x4xf32>
    %41 = vector.shape_cast %40 : vector<64x4xf32> to vector<8x8x4xf32>
    %42 = vector.extract_strided_slice %35 {offsets = [128, 8], sizes = [64, 32], strides = [1, 1]} : vector<192x40xf32> to vector<64x32xf32>
    %43 = vector.shape_cast %42 : vector<64x32xf32> to vector<8x8x32xf32>
    %cst_22 = arith.constant 0.000000e+00 : f32
    %44 = vector.broadcast %cst_22 : f32 to vector<8x8x8xf32>
    %45 = vector.extract_strided_slice %39 {offsets = [0, 0, 0], sizes = [8, 8, 1], strides = [1, 1, 1]} : vector<8x8x4xf32> to vector<8x8x1xf32>
    %46 = vector.shape_cast %45 : vector<8x8x1xf32> to vector<8x8xf32>
    %47 = vector.shape_cast %46 : vector<8x8xf32> to vector<8x8x1xf32>
    %48 = vector.extract_strided_slice %41 {offsets = [0, 0, 0], sizes = [8, 8, 1], strides = [1, 1, 1]} : vector<8x8x4xf32> to vector<8x8x1xf32>
    %49 = vector.shape_cast %48 : vector<8x8x1xf32> to vector<8x8xf32>
    %50 = vector.shape_cast %49 : vector<8x8xf32> to vector<8x1x8xf32>
    %51 = vector.broadcast %47 : vector<8x8x1xf32> to vector<8x8x8xf32>
    %52 = vector.broadcast %50 : vector<8x1x8xf32> to vector<8x8x8xf32>
    %53 = arith.mulf %51, %52 : vector<8x8x8xf32>
    %cst_23 = arith.constant dense<0xFF800000> : vector<8x8xf32>
    %54 = vector.multi_reduction <maximumf>, %53, %cst_23 [2] : vector<8x8x8xf32> to vector<8x8xf32>
    %55 = vector.shape_cast %54 : vector<8x8xf32> to vector<8x8x1xf32>
    %56 = vector.broadcast %55 : vector<8x8x1xf32> to vector<8x8x8xf32>
    %57 = arith.subf %53, %56 : vector<8x8x8xf32>
    %58 = math.exp %57 : vector<8x8x8xf32>
    %cst_24 = arith.constant dense<0.000000e+00> : vector<8x8xf32>
    %59 = vector.multi_reduction <add>, %58, %cst_24 [2] : vector<8x8x8xf32> to vector<8x8xf32>
    %60 = vector.shape_cast %59 : vector<8x8xf32> to vector<8x8x1xf32>
    %cst_25 = arith.constant 2.500000e-01 : f32
    %61 = vector.broadcast %cst_25 : f32 to vector<8x8x1xf32>
    %62 = arith.divf %61, %60 : vector<8x8x1xf32>
    %63 = vector.broadcast %62 : vector<8x8x1xf32> to vector<8x8x8xf32>
    %64 = arith.mulf %58, %63 : vector<8x8x8xf32>
    %65 = arith.addf %44, %64 : vector<8x8x8xf32>
    %66 = vector.extract_strided_slice %39 {offsets = [0, 0, 1], sizes = [8, 8, 1], strides = [1, 1, 1]} : vector<8x8x4xf32> to vector<8x8x1xf32>
    %67 = vector.shape_cast %66 : vector<8x8x1xf32> to vector<8x8xf32>
    %68 = vector.shape_cast %67 : vector<8x8xf32> to vector<8x8x1xf32>
    %69 = vector.extract_strided_slice %41 {offsets = [0, 0, 1], sizes = [8, 8, 1], strides = [1, 1, 1]} : vector<8x8x4xf32> to vector<8x8x1xf32>
    %70 = vector.shape_cast %69 : vector<8x8x1xf32> to vector<8x8xf32>
    %71 = vector.shape_cast %70 : vector<8x8xf32> to vector<8x1x8xf32>
    %72 = vector.broadcast %68 : vector<8x8x1xf32> to vector<8x8x8xf32>
    %73 = vector.broadcast %71 : vector<8x1x8xf32> to vector<8x8x8xf32>
    %74 = arith.mulf %72, %73 : vector<8x8x8xf32>
    %cst_26 = arith.constant dense<0xFF800000> : vector<8x8xf32>
    %75 = vector.multi_reduction <maximumf>, %74, %cst_26 [2] : vector<8x8x8xf32> to vector<8x8xf32>
    %76 = vector.shape_cast %75 : vector<8x8xf32> to vector<8x8x1xf32>
    %77 = vector.broadcast %76 : vector<8x8x1xf32> to vector<8x8x8xf32>
    %78 = arith.subf %74, %77 : vector<8x8x8xf32>
    %79 = math.exp %78 : vector<8x8x8xf32>
    %cst_27 = arith.constant dense<0.000000e+00> : vector<8x8xf32>
    %80 = vector.multi_reduction <add>, %79, %cst_27 [2] : vector<8x8x8xf32> to vector<8x8xf32>
    %81 = vector.shape_cast %80 : vector<8x8xf32> to vector<8x8x1xf32>
    %cst_28 = arith.constant 2.500000e-01 : f32
    %82 = vector.broadcast %cst_28 : f32 to vector<8x8x1xf32>
    %83 = arith.divf %82, %81 : vector<8x8x1xf32>
    %84 = vector.broadcast %83 : vector<8x8x1xf32> to vector<8x8x8xf32>
    %85 = arith.mulf %79, %84 : vector<8x8x8xf32>
    %86 = arith.addf %65, %85 : vector<8x8x8xf32>
    %87 = vector.extract_strided_slice %39 {offsets = [0, 0, 2], sizes = [8, 8, 1], strides = [1, 1, 1]} : vector<8x8x4xf32> to vector<8x8x1xf32>
    %88 = vector.shape_cast %87 : vector<8x8x1xf32> to vector<8x8xf32>
    %89 = vector.shape_cast %88 : vector<8x8xf32> to vector<8x8x1xf32>
    %90 = vector.extract_strided_slice %41 {offsets = [0, 0, 2], sizes = [8, 8, 1], strides = [1, 1, 1]} : vector<8x8x4xf32> to vector<8x8x1xf32>
    %91 = vector.shape_cast %90 : vector<8x8x1xf32> to vector<8x8xf32>
    %92 = vector.shape_cast %91 : vector<8x8xf32> to vector<8x1x8xf32>
    %93 = vector.broadcast %89 : vector<8x8x1xf32> to vector<8x8x8xf32>
    %94 = vector.broadcast %92 : vector<8x1x8xf32> to vector<8x8x8xf32>
    %95 = arith.mulf %93, %94 : vector<8x8x8xf32>
    %cst_29 = arith.constant dense<0xFF800000> : vector<8x8xf32>
    %96 = vector.multi_reduction <maximumf>, %95, %cst_29 [2] : vector<8x8x8xf32> to vector<8x8xf32>
    %97 = vector.shape_cast %96 : vector<8x8xf32> to vector<8x8x1xf32>
    %98 = vector.broadcast %97 : vector<8x8x1xf32> to vector<8x8x8xf32>
    %99 = arith.subf %95, %98 : vector<8x8x8xf32>
    %100 = math.exp %99 : vector<8x8x8xf32>
    %cst_30 = arith.constant dense<0.000000e+00> : vector<8x8xf32>
    %101 = vector.multi_reduction <add>, %100, %cst_30 [2] : vector<8x8x8xf32> to vector<8x8xf32>
    %102 = vector.shape_cast %101 : vector<8x8xf32> to vector<8x8x1xf32>
    %cst_31 = arith.constant 2.500000e-01 : f32
    %103 = vector.broadcast %cst_31 : f32 to vector<8x8x1xf32>
    %104 = arith.divf %103, %102 : vector<8x8x1xf32>
    %105 = vector.broadcast %104 : vector<8x8x1xf32> to vector<8x8x8xf32>
    %106 = arith.mulf %100, %105 : vector<8x8x8xf32>
    %107 = arith.addf %86, %106 : vector<8x8x8xf32>
    %108 = vector.extract_strided_slice %39 {offsets = [0, 0, 3], sizes = [8, 8, 1], strides = [1, 1, 1]} : vector<8x8x4xf32> to vector<8x8x1xf32>
    %109 = vector.shape_cast %108 : vector<8x8x1xf32> to vector<8x8xf32>
    %110 = vector.shape_cast %109 : vector<8x8xf32> to vector<8x8x1xf32>
    %111 = vector.extract_strided_slice %41 {offsets = [0, 0, 3], sizes = [8, 8, 1], strides = [1, 1, 1]} : vector<8x8x4xf32> to vector<8x8x1xf32>
    %112 = vector.shape_cast %111 : vector<8x8x1xf32> to vector<8x8xf32>
    %113 = vector.shape_cast %112 : vector<8x8xf32> to vector<8x1x8xf32>
    %114 = vector.broadcast %110 : vector<8x8x1xf32> to vector<8x8x8xf32>
    %115 = vector.broadcast %113 : vector<8x1x8xf32> to vector<8x8x8xf32>
    %116 = arith.mulf %114, %115 : vector<8x8x8xf32>
    %cst_32 = arith.constant dense<0xFF800000> : vector<8x8xf32>
    %117 = vector.multi_reduction <maximumf>, %116, %cst_32 [2] : vector<8x8x8xf32> to vector<8x8xf32>
    %118 = vector.shape_cast %117 : vector<8x8xf32> to vector<8x8x1xf32>
    %119 = vector.broadcast %118 : vector<8x8x1xf32> to vector<8x8x8xf32>
    %120 = arith.subf %116, %119 : vector<8x8x8xf32>
    %121 = math.exp %120 : vector<8x8x8xf32>
    %cst_33 = arith.constant dense<0.000000e+00> : vector<8x8xf32>
    %122 = vector.multi_reduction <add>, %121, %cst_33 [2] : vector<8x8x8xf32> to vector<8x8xf32>
    %123 = vector.shape_cast %122 : vector<8x8xf32> to vector<8x8x1xf32>
    %cst_34 = arith.constant 2.500000e-01 : f32
    %124 = vector.broadcast %cst_34 : f32 to vector<8x8x1xf32>
    %125 = arith.divf %124, %123 : vector<8x8x1xf32>
    %126 = vector.broadcast %125 : vector<8x8x1xf32> to vector<8x8x8xf32>
    %127 = arith.mulf %121, %126 : vector<8x8x8xf32>
    %128 = arith.addf %107, %127 : vector<8x8x8xf32>
    %129 = vector.extract_strided_slice %128 {offsets = [0, 0, 0], sizes = [8, 8, 1], strides = [1, 1, 1]} : vector<8x8x8xf32> to vector<8x8x1xf32>
    %130 = vector.extract_strided_slice %43 {offsets = [0, 0, 0], sizes = [8, 1, 32], strides = [1, 1, 1]} : vector<8x8x32xf32> to vector<8x1x32xf32>
    %131 = vector.broadcast %129 : vector<8x8x1xf32> to vector<8x8x32xf32>
    %132 = vector.broadcast %130 : vector<8x1x32xf32> to vector<8x8x32xf32>
    %133 = arith.mulf %131, %132 : vector<8x8x32xf32>
    %134 = vector.extract_strided_slice %128 {offsets = [0, 0, 1], sizes = [8, 8, 1], strides = [1, 1, 1]} : vector<8x8x8xf32> to vector<8x8x1xf32>
    %135 = vector.extract_strided_slice %43 {offsets = [0, 1, 0], sizes = [8, 1, 32], strides = [1, 1, 1]} : vector<8x8x32xf32> to vector<8x1x32xf32>
    %136 = vector.broadcast %134 : vector<8x8x1xf32> to vector<8x8x32xf32>
    %137 = vector.broadcast %135 : vector<8x1x32xf32> to vector<8x8x32xf32>
    %138 = arith.mulf %136, %137 : vector<8x8x32xf32>
    %139 = arith.addf %133, %138 : vector<8x8x32xf32>
    %140 = vector.extract_strided_slice %128 {offsets = [0, 0, 2], sizes = [8, 8, 1], strides = [1, 1, 1]} : vector<8x8x8xf32> to vector<8x8x1xf32>
    %141 = vector.extract_strided_slice %43 {offsets = [0, 2, 0], sizes = [8, 1, 32], strides = [1, 1, 1]} : vector<8x8x32xf32> to vector<8x1x32xf32>
    %142 = vector.broadcast %140 : vector<8x8x1xf32> to vector<8x8x32xf32>
    %143 = vector.broadcast %141 : vector<8x1x32xf32> to vector<8x8x32xf32>
    %144 = arith.mulf %142, %143 : vector<8x8x32xf32>
    %145 = arith.addf %139, %144 : vector<8x8x32xf32>
    %146 = vector.extract_strided_slice %128 {offsets = [0, 0, 3], sizes = [8, 8, 1], strides = [1, 1, 1]} : vector<8x8x8xf32> to vector<8x8x1xf32>
    %147 = vector.extract_strided_slice %43 {offsets = [0, 3, 0], sizes = [8, 1, 32], strides = [1, 1, 1]} : vector<8x8x32xf32> to vector<8x1x32xf32>
    %148 = vector.broadcast %146 : vector<8x8x1xf32> to vector<8x8x32xf32>
    %149 = vector.broadcast %147 : vector<8x1x32xf32> to vector<8x8x32xf32>
    %150 = arith.mulf %148, %149 : vector<8x8x32xf32>
    %151 = arith.addf %145, %150 : vector<8x8x32xf32>
    %152 = vector.extract_strided_slice %128 {offsets = [0, 0, 4], sizes = [8, 8, 1], strides = [1, 1, 1]} : vector<8x8x8xf32> to vector<8x8x1xf32>
    %153 = vector.extract_strided_slice %43 {offsets = [0, 4, 0], sizes = [8, 1, 32], strides = [1, 1, 1]} : vector<8x8x32xf32> to vector<8x1x32xf32>
    %154 = vector.broadcast %152 : vector<8x8x1xf32> to vector<8x8x32xf32>
    %155 = vector.broadcast %153 : vector<8x1x32xf32> to vector<8x8x32xf32>
    %156 = arith.mulf %154, %155 : vector<8x8x32xf32>
    %157 = arith.addf %151, %156 : vector<8x8x32xf32>
    %158 = vector.extract_strided_slice %128 {offsets = [0, 0, 5], sizes = [8, 8, 1], strides = [1, 1, 1]} : vector<8x8x8xf32> to vector<8x8x1xf32>
    %159 = vector.extract_strided_slice %43 {offsets = [0, 5, 0], sizes = [8, 1, 32], strides = [1, 1, 1]} : vector<8x8x32xf32> to vector<8x1x32xf32>
    %160 = vector.broadcast %158 : vector<8x8x1xf32> to vector<8x8x32xf32>
    %161 = vector.broadcast %159 : vector<8x1x32xf32> to vector<8x8x32xf32>
    %162 = arith.mulf %160, %161 : vector<8x8x32xf32>
    %163 = arith.addf %157, %162 : vector<8x8x32xf32>
    %164 = vector.extract_strided_slice %128 {offsets = [0, 0, 6], sizes = [8, 8, 1], strides = [1, 1, 1]} : vector<8x8x8xf32> to vector<8x8x1xf32>
    %165 = vector.extract_strided_slice %43 {offsets = [0, 6, 0], sizes = [8, 1, 32], strides = [1, 1, 1]} : vector<8x8x32xf32> to vector<8x1x32xf32>
    %166 = vector.broadcast %164 : vector<8x8x1xf32> to vector<8x8x32xf32>
    %167 = vector.broadcast %165 : vector<8x1x32xf32> to vector<8x8x32xf32>
    %168 = arith.mulf %166, %167 : vector<8x8x32xf32>
    %169 = arith.addf %163, %168 : vector<8x8x32xf32>
    %170 = vector.extract_strided_slice %128 {offsets = [0, 0, 7], sizes = [8, 8, 1], strides = [1, 1, 1]} : vector<8x8x8xf32> to vector<8x8x1xf32>
    %171 = vector.extract_strided_slice %43 {offsets = [0, 7, 0], sizes = [8, 1, 32], strides = [1, 1, 1]} : vector<8x8x32xf32> to vector<8x1x32xf32>
    %172 = vector.broadcast %170 : vector<8x8x1xf32> to vector<8x8x32xf32>
    %173 = vector.broadcast %171 : vector<8x1x32xf32> to vector<8x8x32xf32>
    %174 = arith.mulf %172, %173 : vector<8x8x32xf32>
    %175 = arith.addf %169, %174 : vector<8x8x32xf32>
    %176 = vector.shape_cast %175 : vector<8x8x32xf32> to vector<64x32xf32>
    %c0_35 = arith.constant 0 : index
    %c0_36 = arith.constant 0 : index
    %177 = vector.load %arg8[%c0_35, %c0_36] : memref<32x32xf32, #tpu.memory_space<vmem>>, vector<32x32xf32>
    %cst_37 = arith.constant dense<0.000000e+00> : vector<64x32xf32>
    %178 = tpu.matmul %176, %177, %cst_37 {dimension_numbers = #tpu.dot_dimension_numbers<[1], [0], [0], [1], [0, 0, 1, 1], [], []>} : vector<64x32xf32>, vector<32x32xf32>, vector<64x32xf32> -> vector<64x32xf32>
    %c0_38 = arith.constant 0 : index
    %c0_39 = arith.constant 0 : index
    %179 = vector.load %arg9[%c0_38, %c0_39] : memref<1x32xf32, #tpu.memory_space<vmem>>, vector<1x32xf32>
    %180 = vector.broadcast %179 : vector<1x32xf32> to vector<64x32xf32>
    %181 = arith.addf %178, %180 : vector<64x32xf32>
    %182 = vector.shape_cast %181 : vector<64x32xf32> to vector<8x8x32xf32>
    %183 = arith.addf %182, %0 : vector<8x8x32xf32>
    %c0_40 = arith.constant 0 : index
    %c0_41 = arith.constant 0 : index
    %c0_42 = arith.constant 0 : index
    %184 = vector.load %arg10[%c0_40, %c0_41, %c0_42] : memref<8x8x32xf32, #tpu.memory_space<vmem>>, vector<8x8x32xf32>
    tpu.vector_store %arg10[%c0_40, %c0_41, %c0_42], %183 {strides = array<i32>} : memref<8x8x32xf32, #tpu.memory_space<vmem>>, vector<8x8x32xf32>,
    %c0_43 = arith.constant 0 : index
    %c0_44 = arith.constant 0 : index
    %c0_45 = arith.constant 0 : index
    %185 = vector.load %arg11[%c0_43, %c0_44, %c0_45] : memref<8x8x8xf32, #tpu.memory_space<vmem>>, vector<8x8x8xf32>
    tpu.vector_store %arg11[%c0_43, %c0_44, %c0_45], %128 {strides = array<i32>} : memref<8x8x8xf32, #tpu.memory_space<vmem>>, vector<8x8x8xf32>,
    return
  }
  func.func @transform_0(%arg0: i32) -> (i32, i32, i32) {
    %c0_i32 = arith.constant 0 : i32
    %c0_i32_0 = arith.constant 0 : i32
    %c0_i32_1 = arith.constant 0 : i32
    return %arg0, %c0_i32, %c0_i32_0 : i32, i32, i32
  }
  func.func @transform_1(%arg0: i32) -> (i32, i32, i32) {
    %c0_i32 = arith.constant 0 : i32
    %c0_i32_0 = arith.constant 0 : i32
    %c0_i32_1 = arith.constant 0 : i32
    return %arg0, %c0_i32, %c0_i32_0 : i32, i32, i32
  }
  func.func @transform_2(%arg0: i32) -> (i32, i32, i32) {
    %c0_i32 = arith.constant 0 : i32
    %c0_i32_0 = arith.constant 0 : i32
    %c0_i32_1 = arith.constant 0 : i32
    return %arg0, %c0_i32, %c0_i32_0 : i32, i32, i32
  }
  func.func @transform_3(%arg0: i32) -> (i32, i32) {
    %c0_i32 = arith.constant 0 : i32
    %c0_i32_0 = arith.constant 0 : i32
    %c0_i32_1 = arith.constant 0 : i32
    return %c0_i32, %c0_i32_0 : i32, i32
  }
  func.func @transform_4(%arg0: i32) -> (i32, i32) {
    %c0_i32 = arith.constant 0 : i32
    %c0_i32_0 = arith.constant 0 : i32
    %c0_i32_1 = arith.constant 0 : i32
    return %c0_i32, %c0_i32_0 : i32, i32
  }
  func.func @transform_5(%arg0: i32) -> (i32, i32) {
    %c0_i32 = arith.constant 0 : i32
    %c0_i32_0 = arith.constant 0 : i32
    %c0_i32_1 = arith.constant 0 : i32
    return %c0_i32, %c0_i32_0 : i32, i32
  }
  func.func @transform_6(%arg0: i32) -> (i32, i32) {
    %c0_i32 = arith.constant 0 : i32
    %c0_i32_0 = arith.constant 0 : i32
    %c0_i32_1 = arith.constant 0 : i32
    return %c0_i32, %c0_i32_0 : i32, i32
  }
  func.func @transform_7(%arg0: i32) -> (i32, i32) {
    %c0_i32 = arith.constant 0 : i32
    %c0_i32_0 = arith.constant 0 : i32
    %c0_i32_1 = arith.constant 0 : i32
    return %c0_i32, %c0_i32_0 : i32, i32
  }
  func.func @transform_8(%arg0: i32) -> (i32, i32) {
    %c0_i32 = arith.constant 0 : i32
    %c0_i32_0 = arith.constant 0 : i32
    %c0_i32_1 = arith.constant 0 : i32
    return %c0_i32, %c0_i32_0 : i32, i32
  }
  func.func @transform_9(%arg0: i32) -> (i32, i32, i32) {
    %c0_i32 = arith.constant 0 : i32
    %c0_i32_0 = arith.constant 0 : i32
    %c0_i32_1 = arith.constant 0 : i32
    return %arg0, %c0_i32, %c0_i32_0 : i32, i32, i32
  }
  func.func @transform_10(%arg0: i32) -> (i32, i32, i32) {
    %c0_i32 = arith.constant 0 : i32
    %c0_i32_0 = arith.constant 0 : i32
    %c0_i32_1 = arith.constant 0 : i32
    return %arg0, %c0_i32, %c0_i32_0 : i32, i32, i32
  }
}

</mosaic_0001>

<llo_original>
// kernel: tpu_custom_call.1
$region0: #{tpu_custom_call.1}
  #allocation0 [shape = 'u32[]', space=smem, size = 0x4, offset = 0x4, fixed_abs, tag = 'smem constant byte address 0x4 - core index']
  #allocation1 [shape = 'u32[144,128]{1,0:T(1,128)}', space=vmem, size = 0x12000, scoped, tag = 'internal scratch']
  %s0 = inlined_call_operand.hbm [shape: f32[8,8,32], index: 0, kind: input, shape index: {}]
  %s1 = inlined_call_operand.hbm [shape: f32[8,8,32], index: 1, kind: input, shape index: {}]
  %s2 = inlined_call_operand.hbm [shape: f32[8,8,32], index: 2, kind: input, shape index: {}]
  %s3 = inlined_call_operand.vmem [shape: f32[1,32], index: 3, kind: input, shape index: {}]
  %s4 = inlined_call_operand.vmem [shape: f32[1,32], index: 4, kind: input, shape index: {}]
  %s5 = inlined_call_operand.hbm [shape: f32[32,40], index: 5, kind: input, shape index: {}]
  %s6 = inlined_call_operand.vmem [shape: f32[1,40], index: 6, kind: input, shape index: {}]
  %s7 = inlined_call_operand.hbm [shape: f32[32,32], index: 7, kind: input, shape index: {}]
  %s8 = inlined_call_operand.vmem [shape: f32[1,32], index: 8, kind: input, shape index: {}]
  %s9 = inlined_call_operand.hbm [shape: f32[8,8,32], index: 9, kind: output, shape index: {0}]
  %s10 = inlined_call_operand.hbm [shape: f32[8,8,8], index: 10, kind: output, shape index: {1}]
  %11 = xla_tuple %s9, %s10
  %s12 = sld [smem:[#allocation0]]
  $region74: #{tpu_custom_call.1} parent=0
    _
  %s14 = ssub.s32 1, %s12
  %s15 = scalar_select 0, %s14, %s12
  $region1: #{tpu_custom_call.1} parent=0
    #allocation2 [shape = 'u8[32768]{0}', space=vmem, size = 0x8000, scoped, tag = 'input window, operand 0, single buffered']
    #allocation3 [shape = 's32[1]{0}', space=sflag, size = 0x4, scoped, tag = 'scoped memory for tpu_custom_call.1']
    #allocation4 [shape = 's32[1]{0}', space=sflag, size = 0x4, scoped, tag = 'scoped memory for tpu_custom_call.1']
    #allocation5 [shape = 'u8[32768]{0}', space=vmem, size = 0x8000, scoped, tag = 'input window, operand 1, single buffered']
    #allocation6 [shape = 's32[1]{0}', space=sflag, size = 0x4, scoped, tag = 'scoped memory for tpu_custom_call.1']
    #allocation7 [shape = 'u8[32768]{0}', space=vmem, size = 0x8000, scoped, tag = 'input window, operand 2, single buffered']
    #allocation8 [shape = 'u8[16384]{0}', space=vmem, size = 0x4000, scoped, tag = 'input window, operand 5, single buffered']
    #allocation9 [shape = 's32[1]{0}', space=sflag, size = 0x4, scoped, tag = 'scoped memory for tpu_custom_call.1']
    #allocation10 [shape = 'u8[16384]{0}', space=vmem, size = 0x4000, scoped, tag = 'input window, operand 7, single buffered']
    #allocation11 [shape = 'u8[32768]{0}', space=vmem, size = 0x8000, scoped, tag = 'output window, operand 0, single buffered']
    #allocation12 [shape = 'u8[32768]{0}', space=vmem, size = 0x8000, scoped, tag = 'output window, operand 1, single buffered']
    #allocation13 [shape = 's32[1]{0}', space=sflag, size = 0x4, scoped, tag = 'scoped memory for tpu_custom_call.1']
    %16 = vsyncpa [#allocation3], 0
    %17 = vsyncpa [#allocation6], 0
    %18 = vsyncpa [#allocation9], 0
    %19 = vsyncpa [#allocation4], 0
    %20 = vsyncpa [#allocation13], 0
    // Predicated region
    $region2: #{tpu_custom_call.1} parent=1 // pred_check
      _
    $region3: #{tpu_custom_call.1} parent=1 // pred_check_branch
      %22 = sbr.rel (0) target = $region5
    $region4: #{tpu_custom_call.1} parent=1 // pred_region
      %s24 = ssub.s32 1024, 1024
      %25 = vsyncadd [#allocation3], %s24
      %s26 = sshll.u32 [#allocation2], 4
      %s27 = int_to_ptr.vmem [resolvable:$true] %s26
      %32 = dma.hbm_to_vmem [thread:$0]  %s0, 1024, %s27, [#allocation3], 128, 128, 8
    $region5: #{tpu_custom_call.1} parent=1 // pred_fallthru
      _
    // Predicated region
    $region6: #{tpu_custom_call.1} parent=1 // pred_check
      _
    $region7: #{tpu_custom_call.1} parent=1 // pred_check_branch
      %34 = sbr.rel (0) target = $region9
    $region8: #{tpu_custom_call.1} parent=1 // pred_region
      %s36 = ssub.s32 1024, 1024
      %37 = vsyncadd [#allocation6], %s36
      %s38 = sshll.u32 [#allocation5], 4
      %s39 = int_to_ptr.vmem [resolvable:$true] %s38
      %44 = dma.hbm_to_vmem [thread:$0]  %s1, 1024, %s39, [#allocation6], 128, 128, 8
    $region9: #{tpu_custom_call.1} parent=1 // pred_fallthru
      _
    // Predicated region
    $region10: #{tpu_custom_call.1} parent=1 // pred_check
      _
    $region11: #{tpu_custom_call.1} parent=1 // pred_check_branch
      %46 = sbr.rel (0) target = $region13
    $region12: #{tpu_custom_call.1} parent=1 // pred_region
      %s48 = ssub.s32 1024, 1024
      %49 = vsyncadd [#allocation6], %s48
      %s50 = sshll.u32 [#allocation7], 4
      %s51 = int_to_ptr.vmem [resolvable:$true] %s50
      %56 = dma.hbm_to_vmem [thread:$0]  %s2, 1024, %s51, [#allocation6], 128, 128, 8
    $region13: #{tpu_custom_call.1} parent=1 // pred_fallthru
      _
    // Predicated region
    $region14: #{tpu_custom_call.1} parent=1 // pred_check
      _
    $region15: #{tpu_custom_call.1} parent=1 // pred_check_branch
      %58 = sbr.rel (0) target = $region17
    $region16: #{tpu_custom_call.1} parent=1 // pred_region
      _
    $region17: #{tpu_custom_call.1} parent=1 // pred_fallthru
      _
    // Predicated region
    $region18: #{tpu_custom_call.1} parent=1 // pred_check
      _
    $region19: #{tpu_custom_call.1} parent=1 // pred_check_branch
      %60 = sbr.rel (0) target = $region21
    $region20: #{tpu_custom_call.1} parent=1 // pred_region
      _
    $region21: #{tpu_custom_call.1} parent=1 // pred_fallthru
      _
    // Predicated region
    $region22: #{tpu_custom_call.1} parent=1 // pred_check
      _
    $region23: #{tpu_custom_call.1} parent=1 // pred_check_branch
      %62 = sbr.rel (0) target = $region25
    $region24: #{tpu_custom_call.1} parent=1 // pred_region
      %s64 = ssub.s32 512, 512
      %65 = vsyncadd [#allocation9], %s64
      %s66 = sshll.u32 [#allocation8], 4
      %s67 = int_to_ptr.vmem [resolvable:$true] %s66
      %72 = dma.hbm_to_vmem [thread:$0]  %s5, 512, %s67, [#allocation9], 128, 128, 8
    $region25: #{tpu_custom_call.1} parent=1 // pred_fallthru
      _
    // Predicated region
    $region26: #{tpu_custom_call.1} parent=1 // pred_check
      _
    $region27: #{tpu_custom_call.1} parent=1 // pred_check_branch
      %74 = sbr.rel (0) target = $region29
    $region28: #{tpu_custom_call.1} parent=1 // pred_region
      _
    $region29: #{tpu_custom_call.1} parent=1 // pred_fallthru
      _
    // Predicated region
    $region30: #{tpu_custom_call.1} parent=1 // pred_check
      _
    $region31: #{tpu_custom_call.1} parent=1 // pred_check_branch
      %76 = sbr.rel (0) target = $region33
    $region32: #{tpu_custom_call.1} parent=1 // pred_region
      %s78 = ssub.s32 512, 512
      %79 = vsyncadd [#allocation9], %s78
      %s80 = sshll.u32 [#allocation10], 4
      %s81 = int_to_ptr.vmem [resolvable:$true] %s80
      %86 = dma.hbm_to_vmem [thread:$0]  %s7, 512, %s81, [#allocation9], 128, 128, 8
    $region33: #{tpu_custom_call.1} parent=1 // pred_fallthru
      _
    // Predicated region
    $region34: #{tpu_custom_call.1} parent=1 // pred_check
      _
    $region35: #{tpu_custom_call.1} parent=1 // pred_check_branch
      %88 = sbr.rel (0) target = $region37
    $region36: #{tpu_custom_call.1} parent=1 // pred_region
      _
    $region37: #{tpu_custom_call.1} parent=1 // pred_fallthru
      _
    // Predicated region
    $region38: #{tpu_custom_call.1} parent=1 // pred_check
      _
    $region39: #{tpu_custom_call.1} parent=1 // pred_check_branch
      %90 = sbr.rel (0) target = $region41
    $region40: #{tpu_custom_call.1} parent=1 // pred_region
      %91 = dma.done [#allocation3], 1024
    $region41: #{tpu_custom_call.1} parent=1 // pred_fallthru
      _
    // Predicated region
    $region42: #{tpu_custom_call.1} parent=1 // pred_check
      _
    $region43: #{tpu_custom_call.1} parent=1 // pred_check_branch
      %93 = sbr.rel (0) target = $region45
    $region44: #{tpu_custom_call.1} parent=1 // pred_region
      %94 = dma.done [#allocation6], 1024
    $region45: #{tpu_custom_call.1} parent=1 // pred_fallthru
      _
    // Predicated region
    $region46: #{tpu_custom_call.1} parent=1 // pred_check
      _
    $region47: #{tpu_custom_call.1} parent=1 // pred_check_branch
      %96 = sbr.rel (0) target = $region49
    $region48: #{tpu_custom_call.1} parent=1 // pred_region
      %97 = dma.done [#allocation6], 1024
    $region49: #{tpu_custom_call.1} parent=1 // pred_fallthru
      _
    // Predicated region
    $region50: #{tpu_custom_call.1} parent=1 // pred_check
      _
    $region51: #{tpu_custom_call.1} parent=1 // pred_check_branch
      %99 = sbr.rel (0) target = $region53
    $region52: #{tpu_custom_call.1} parent=1 // pred_region
      %100 = dma.done [#allocation9], 512
    $region53: #{tpu_custom_call.1} parent=1 // pred_fallthru
      _
    // Predicated region
    $region54: #{tpu_custom_call.1} parent=1 // pred_check
      _
    $region55: #{tpu_custom_call.1} parent=1 // pred_check_branch
      %102 = sbr.rel (0) target = $region57
    $region56: #{tpu_custom_call.1} parent=1 // pred_region
      %103 = dma.done [#allocation9], 512
    $region57: #{tpu_custom_call.1} parent=1 // pred_fallthru
      _
    %v104 = vld [vmem:[#allocation2] sm:$0xff]
    %v105 = vld [vmem:[#allocation2 + $0x8] sm:$0xff]
    %v106 = vld [vmem:[#allocation2 + $0x10] sm:$0xff]
    %v107 = vld [vmem:[#allocation2 + $0x18] sm:$0xff]
    %v108 = vld [vmem:[#allocation2 + $0x20] sm:$0xff]
    %v109 = vld [vmem:[#allocation2 + $0x28] sm:$0xff]
    %v110 = vld [vmem:[#allocation2 + $0x30] sm:$0xff]
    %v111 = vld [vmem:[#allocation2 + $0x38] sm:$0xff]
    %v112 = vld [vmem:[#allocation5] sm:$0xff]
    %v113 = vld [vmem:[#allocation5 + $0x8] sm:$0xff]
    %v114 = vld [vmem:[#allocation5 + $0x10] sm:$0xff]
    %v115 = vld [vmem:[#allocation5 + $0x18] sm:$0xff]
    %v116 = vld [vmem:[#allocation5 + $0x20] sm:$0xff]
    %v117 = vld [vmem:[#allocation5 + $0x28] sm:$0xff]
    %v118 = vld [vmem:[#allocation5 + $0x30] sm:$0xff]
    %v119 = vld [vmem:[#allocation5 + $0x38] sm:$0xff]
    %v120 = vld [vmem:[#allocation7] sm:$0xff]
    %v121 = vld [vmem:[#allocation7 + $0x8] sm:$0xff]
    %v122 = vld [vmem:[#allocation7 + $0x10] sm:$0xff]
    %v123 = vld [vmem:[#allocation7 + $0x18] sm:$0xff]
    %v124 = vld [vmem:[#allocation7 + $0x20] sm:$0xff]
    %v125 = vld [vmem:[#allocation7 + $0x28] sm:$0xff]
    %v126 = vld [vmem:[#allocation7 + $0x30] sm:$0xff]
    %v127 = vld [vmem:[#allocation7 + $0x38] sm:$0xff]
    %vm128 = vcmask 261120
    %v129 = vsel %vm128, %v104, 0.0
    %130 = vadd.xlane.f32.xlu0 %v129
    %v131 = vpop.xlane.xlu0 %130
    %v132 = vsel %vm128, %v105, 0.0
    %133 = vadd.xlane.f32.xlu0 %v132
    %v134 = vpop.xlane.xlu0 %133
    %v135 = vsel %vm128, %v106, 0.0
    %136 = vadd.xlane.f32.xlu0 %v135
    %v137 = vpop.xlane.xlu0 %136
    %v138 = vsel %vm128, %v107, 0.0
    %139 = vadd.xlane.f32.xlu0 %v138
    %v140 = vpop.xlane.xlu0 %139
    %v141 = vsel %vm128, %v108, 0.0
    %142 = vadd.xlane.f32.xlu0 %v141
    %v143 = vpop.xlane.xlu0 %142
    %v144 = vsel %vm128, %v109, 0.0
    %145 = vadd.xlane.f32.xlu0 %v144
    %v146 = vpop.xlane.xlu0 %145
    %v147 = vsel %vm128, %v110, 0.0
    %148 = vadd.xlane.f32.xlu0 %v147
    %v149 = vpop.xlane.xlu0 %148
    %v150 = vsel %vm128, %v111, 0.0
    %151 = vadd.xlane.f32.xlu0 %v150
    %v152 = vpop.xlane.xlu0 %151
    %v153 = vsel %vm128, %v112, 0.0
    %154 = vadd.xlane.f32.xlu0 %v153
    %v155 = vpop.xlane.xlu0 %154
    %v156 = vsel %vm128, %v113, 0.0
    %157 = vadd.xlane.f32.xlu0 %v156
    %v158 = vpop.xlane.xlu0 %157
    %v159 = vsel %vm128, %v114, 0.0
    %160 = vadd.xlane.f32.xlu0 %v159
    %v161 = vpop.xlane.xlu0 %160
    %v162 = vsel %vm128, %v115, 0.0
    %163 = vadd.xlane.f32.xlu0 %v162
    %v164 = vpop.xlane.xlu0 %163
    %v165 = vsel %vm128, %v116, 0.0
    %166 = vadd.xlane.f32.xlu0 %v165
    %v167 = vpop.xlane.xlu0 %166
    %v168 = vsel %vm128, %v117, 0.0
    %169 = vadd.xlane.f32.xlu0 %v168
    %v170 = vpop.xlane.xlu0 %169
    %v171 = vsel %vm128, %v118, 0.0
    %172 = vadd.xlane.f32.xlu0 %v171
    %v173 = vpop.xlane.xlu0 %172
    %v174 = vsel %vm128, %v119, 0.0
    %175 = vadd.xlane.f32.xlu0 %v174
    %v176 = vpop.xlane.xlu0 %175
    %v177 = vsel %vm128, %v120, 0.0
    %178 = vadd.xlane.f32.xlu0 %v177
    %v179 = vpop.xlane.xlu0 %178
    %v180 = vsel %vm128, %v121, 0.0
    %181 = vadd.xlane.f32.xlu0 %v180
    %v182 = vpop.xlane.xlu0 %181
    %v183 = vsel %vm128, %v122, 0.0
    %184 = vadd.xlane.f32.xlu0 %v183
    %v185 = vpop.xlane.xlu0 %184
    %v186 = vsel %vm128, %v123, 0.0
    %187 = vadd.xlane.f32.xlu0 %v186
    %v188 = vpop.xlane.xlu0 %187
    %v189 = vsel %vm128, %v124, 0.0
    %190 = vadd.xlane.f32.xlu0 %v189
    %v191 = vpop.xlane.xlu0 %190
    %v192 = vsel %vm128, %v125, 0.0
    %193 = vadd.xlane.f32.xlu0 %v192
    %v194 = vpop.xlane.xlu0 %193
    %v195 = vsel %vm128, %v126, 0.0
    %196 = vadd.xlane.f32.xlu0 %v195
    %v197 = vpop.xlane.xlu0 %196
    %v198 = vsel %vm128, %v127, 0.0
    %199 = vadd.xlane.f32.xlu0 %v198
    %v200 = vpop.xlane.xlu0 %199
    %v201 = vrcp.pop 32.0
    %v202 = vmul.f32 %v131, %v201
    %v203 = vmul.f32 %v134, %v201
    %v204 = vmul.f32 %v137, %v201
    %v205 = vmul.f32 %v140, %v201
    %v206 = vmul.f32 %v143, %v201
    %v207 = vmul.f32 %v146, %v201
    %v208 = vmul.f32 %v149, %v201
    %v209 = vmul.f32 %v152, %v201
    %v210 = vmul.f32 %v155, %v201
    %v211 = vmul.f32 %v158, %v201
    %v212 = vmul.f32 %v161, %v201
    %v213 = vmul.f32 %v164, %v201
    %v214 = vmul.f32 %v167, %v201
    %v215 = vmul.f32 %v170, %v201
    %v216 = vmul.f32 %v173, %v201
    %v217 = vmul.f32 %v176, %v201
    %v218 = vmul.f32 %v179, %v201
    %v219 = vmul.f32 %v182, %v201
    %v220 = vmul.f32 %v185, %v201
    %v221 = vmul.f32 %v188, %v201
    %v222 = vmul.f32 %v191, %v201
    %v223 = vmul.f32 %v194, %v201
    %v224 = vmul.f32 %v197, %v201
    %v225 = vmul.f32 %v200, %v201
    %v226 = vsub.f32 %v104, %v202
    %v227 = vsub.f32 %v105, %v203
    %v228 = vsub.f32 %v106, %v204
    %v229 = vsub.f32 %v107, %v205
    %v230 = vsub.f32 %v108, %v206
    %v231 = vsub.f32 %v109, %v207
    %v232 = vsub.f32 %v110, %v208
    %v233 = vsub.f32 %v111, %v209
    %v234 = vsub.f32 %v112, %v210
    %v235 = vsub.f32 %v113, %v211
    %v236 = vsub.f32 %v114, %v212
    %v237 = vsub.f32 %v115, %v213
    %v238 = vsub.f32 %v116, %v214
    %v239 = vsub.f32 %v117, %v215
    %v240 = vsub.f32 %v118, %v216
    %v241 = vsub.f32 %v119, %v217
    %v242 = vsub.f32 %v120, %v218
    %v243 = vsub.f32 %v121, %v219
    %v244 = vsub.f32 %v122, %v220
    %v245 = vsub.f32 %v123, %v221
    %v246 = vsub.f32 %v124, %v222
    %v247 = vsub.f32 %v125, %v223
    %v248 = vsub.f32 %v126, %v224
    %v249 = vsub.f32 %v127, %v225
    %v250 = vmul.f32 %v226, %v226
    %v251 = vmul.f32 %v227, %v227
    %v252 = vmul.f32 %v228, %v228
    %v253 = vmul.f32 %v229, %v229
    %v254 = vmul.f32 %v230, %v230
    %v255 = vmul.f32 %v231, %v231
    %v256 = vmul.f32 %v232, %v232
    %v257 = vmul.f32 %v233, %v233
    %v258 = vmul.f32 %v234, %v234
    %v259 = vmul.f32 %v235, %v235
    %v260 = vmul.f32 %v236, %v236
    %v261 = vmul.f32 %v237, %v237
    %v262 = vmul.f32 %v238, %v238
    %v263 = vmul.f32 %v239, %v239
    %v264 = vmul.f32 %v240, %v240
    %v265 = vmul.f32 %v241, %v241
    %v266 = vmul.f32 %v242, %v242
    %v267 = vmul.f32 %v243, %v243
    %v268 = vmul.f32 %v244, %v244
    %v269 = vmul.f32 %v245, %v245
    %v270 = vmul.f32 %v246, %v246
    %v271 = vmul.f32 %v247, %v247
    %v272 = vmul.f32 %v248, %v248
    %v273 = vmul.f32 %v249, %v249
    %v274 = vsel %vm128, %v250, 0.0
    %275 = vadd.xlane.f32.xlu0 %v274
    %v276 = vpop.xlane.xlu0 %275
    %v277 = vsel %vm128, %v251, 0.0
    %278 = vadd.xlane.f32.xlu0 %v277
    %v279 = vpop.xlane.xlu0 %278
    %v280 = vsel %vm128, %v252, 0.0
    %281 = vadd.xlane.f32.xlu0 %v280
    %v282 = vpop.xlane.xlu0 %281
    %v283 = vsel %vm128, %v253, 0.0
    %284 = vadd.xlane.f32.xlu0 %v283
    %v285 = vpop.xlane.xlu0 %284
    %v286 = vsel %vm128, %v254, 0.0
    %287 = vadd.xlane.f32.xlu0 %v286
    %v288 = vpop.xlane.xlu0 %287
    %v289 = vsel %vm128, %v255, 0.0
    %290 = vadd.xlane.f32.xlu0 %v289
    %v291 = vpop.xlane.xlu0 %290
    %v292 = vsel %vm128, %v256, 0.0
    %293 = vadd.xlane.f32.xlu0 %v292
    %v294 = vpop.xlane.xlu0 %293
    %v295 = vsel %vm128, %v257, 0.0
    %296 = vadd.xlane.f32.xlu0 %v295
    %v297 = vpop.xlane.xlu0 %296
    %v298 = vsel %vm128, %v258, 0.0
    %299 = vadd.xlane.f32.xlu0 %v298
    %v300 = vpop.xlane.xlu0 %299
    %v301 = vsel %vm128, %v259, 0.0
    %302 = vadd.xlane.f32.xlu0 %v301
    %v303 = vpop.xlane.xlu0 %302
    %v304 = vsel %vm128, %v260, 0.0
    %305 = vadd.xlane.f32.xlu0 %v304
    %v306 = vpop.xlane.xlu0 %305
    %v307 = vsel %vm128, %v261, 0.0
    %308 = vadd.xlane.f32.xlu0 %v307
    %v309 = vpop.xlane.xlu0 %308
    %v310 = vsel %vm128, %v262, 0.0
    %311 = vadd.xlane.f32.xlu0 %v310
    %v312 = vpop.xlane.xlu0 %311
    %v313 = vsel %vm128, %v263, 0.0
    %314 = vadd.xlane.f32.xlu0 %v313
    %v315 = vpop.xlane.xlu0 %314
    %v316 = vsel %vm128, %v264, 0.0
    %317 = vadd.xlane.f32.xlu0 %v316
    %v318 = vpop.xlane.xlu0 %317
    %v319 = vsel %vm128, %v265, 0.0
    %320 = vadd.xlane.f32.xlu0 %v319
    %v321 = vpop.xlane.xlu0 %320
    %v322 = vsel %vm128, %v266, 0.0
    %323 = vadd.xlane.f32.xlu0 %v322
    %v324 = vpop.xlane.xlu0 %323
    %v325 = vsel %vm128, %v267, 0.0
    %326 = vadd.xlane.f32.xlu0 %v325
    %v327 = vpop.xlane.xlu0 %326
    %v328 = vsel %vm128, %v268, 0.0
    %329 = vadd.xlane.f32.xlu0 %v328
    %v330 = vpop.xlane.xlu0 %329
    %v331 = vsel %vm128, %v269, 0.0
    %332 = vadd.xlane.f32.xlu0 %v331
    %v333 = vpop.xlane.xlu0 %332
    %v334 = vsel %vm128, %v270, 0.0
    %335 = vadd.xlane.f32.xlu0 %v334
    %v336 = vpop.xlane.xlu0 %335
    %v337 = vsel %vm128, %v271, 0.0
    %338 = vadd.xlane.f32.xlu0 %v337
    %v339 = vpop.xlane.xlu0 %338
    %v340 = vsel %vm128, %v272, 0.0
    %341 = vadd.xlane.f32.xlu0 %v340
    %v342 = vpop.xlane.xlu0 %341
    %v343 = vsel %vm128, %v273, 0.0
    %344 = vadd.xlane.f32.xlu0 %v343
    %v345 = vpop.xlane.xlu0 %344
    %v346 = vmul.f32 %v276, %v201
    %v347 = vmul.f32 %v279, %v201
    %v348 = vmul.f32 %v282, %v201
    %v349 = vmul.f32 %v285, %v201
    %v350 = vmul.f32 %v288, %v201
    %v351 = vmul.f32 %v291, %v201
    %v352 = vmul.f32 %v294, %v201
    %v353 = vmul.f32 %v297, %v201
    %v354 = vmul.f32 %v300, %v201
    %v355 = vmul.f32 %v303, %v201
    %v356 = vmul.f32 %v306, %v201
    %v357 = vmul.f32 %v309, %v201
    %v358 = vmul.f32 %v312, %v201
    %v359 = vmul.f32 %v315, %v201
    %v360 = vmul.f32 %v318, %v201
    %v361 = vmul.f32 %v321, %v201
    %v362 = vmul.f32 %v324, %v201
    %v363 = vmul.f32 %v327, %v201
    %v364 = vmul.f32 %v330, %v201
    %v365 = vmul.f32 %v333, %v201
    %v366 = vmul.f32 %v336, %v201
    %v367 = vmul.f32 %v339, %v201
    %v368 = vmul.f32 %v342, %v201
    %v369 = vmul.f32 %v345, %v201
    %v370 = vadd.f32 %v346, 1e-05
    %v371 = vadd.f32 %v347, 1e-05
    %v372 = vadd.f32 %v348, 1e-05
    %v373 = vadd.f32 %v349, 1e-05
    %v374 = vadd.f32 %v350, 1e-05
    %v375 = vadd.f32 %v351, 1e-05
    %v376 = vadd.f32 %v352, 1e-05
    %v377 = vadd.f32 %v353, 1e-05
    %v378 = vadd.f32 %v354, 1e-05
    %v379 = vadd.f32 %v355, 1e-05
    %v380 = vadd.f32 %v356, 1e-05
    %v381 = vadd.f32 %v357, 1e-05
    %v382 = vadd.f32 %v358, 1e-05
    %v383 = vadd.f32 %v359, 1e-05
    %v384 = vadd.f32 %v360, 1e-05
    %v385 = vadd.f32 %v361, 1e-05
    %v386 = vadd.f32 %v362, 1e-05
    %v387 = vadd.f32 %v363, 1e-05
    %v388 = vadd.f32 %v364, 1e-05
    %v389 = vadd.f32 %v365, 1e-05
    %v390 = vadd.f32 %v366, 1e-05
    %v391 = vadd.f32 %v367, 1e-05
    %v392 = vadd.f32 %v368, 1e-05
    %v393 = vadd.f32 %v369, 1e-05
    %v394 = vrsqrt.pop %v370
    %v395 = vrsqrt.pop %v371
    %v396 = vrsqrt.pop %v372
    %v397 = vrsqrt.pop %v373
    %v398 = vrsqrt.pop %v374
    %v399 = vrsqrt.pop %v375
    %v400 = vrsqrt.pop %v376
    %v401 = vrsqrt.pop %v377
    %v402 = vrsqrt.pop %v378
    %v403 = vrsqrt.pop %v379
    %v404 = vrsqrt.pop %v380
    %v405 = vrsqrt.pop %v381
    %v406 = vrsqrt.pop %v382
    %v407 = vrsqrt.pop %v383
    %v408 = vrsqrt.pop %v384
    %v409 = vrsqrt.pop %v385
    %v410 = vrsqrt.pop %v386
    %v411 = vrsqrt.pop %v387
    %v412 = vrsqrt.pop %v388
    %v413 = vrsqrt.pop %v389
    %v414 = vrsqrt.pop %v390
    %v415 = vrsqrt.pop %v391
    %v416 = vrsqrt.pop %v392
    %v417 = vrsqrt.pop %v393
    %v418 = vmul.f32 %v226, %v394
    %v419 = vmul.f32 %v227, %v395
    %v420 = vmul.f32 %v228, %v396
    %v421 = vmul.f32 %v229, %v397
    %v422 = vmul.f32 %v230, %v398
    %v423 = vmul.f32 %v231, %v399
    %v424 = vmul.f32 %v232, %v400
    %v425 = vmul.f32 %v233, %v401
    %v426 = vmul.f32 %v234, %v402
    %v427 = vmul.f32 %v235, %v403
    %v428 = vmul.f32 %v236, %v404
    %v429 = vmul.f32 %v237, %v405
    %v430 = vmul.f32 %v238, %v406
    %v431 = vmul.f32 %v239, %v407
    %v432 = vmul.f32 %v240, %v408
    %v433 = vmul.f32 %v241, %v409
    %v434 = vmul.f32 %v242, %v410
    %v435 = vmul.f32 %v243, %v411
    %v436 = vmul.f32 %v244, %v412
    %v437 = vmul.f32 %v245, %v413
    %v438 = vmul.f32 %v246, %v414
    %v439 = vmul.f32 %v247, %v415
    %v440 = vmul.f32 %v248, %v416
    %v441 = vmul.f32 %v249, %v417
    %v442 = vld [vmem:[%s3] sm:$0x1]
    %v444 = vlaneseq
    %v445 = vshrl.u32 %v444, 7
    %v446 = vsub.s32 0, %v445
    %v447 = vrot.slane %v442, %v446
    %v449 = vmul.f32 %v418, %v447
    %v450 = vmul.f32 %v419, %v447
    %v451 = vmul.f32 %v420, %v447
    %v452 = vmul.f32 %v421, %v447
    %v453 = vmul.f32 %v422, %v447
    %v454 = vmul.f32 %v423, %v447
    %v455 = vmul.f32 %v424, %v447
    %v456 = vmul.f32 %v425, %v447
    %v457 = vmul.f32 %v426, %v447
    %v458 = vmul.f32 %v427, %v447
    %v459 = vmul.f32 %v428, %v447
    %v460 = vmul.f32 %v429, %v447
    %v461 = vmul.f32 %v430, %v447
    %v462 = vmul.f32 %v431, %v447
    %v463 = vmul.f32 %v432, %v447
    %v464 = vmul.f32 %v433, %v447
    %v465 = vmul.f32 %v434, %v447
    %v466 = vmul.f32 %v435, %v447
    %v467 = vmul.f32 %v436, %v447
    %v468 = vmul.f32 %v437, %v447
    %v469 = vmul.f32 %v438, %v447
    %v470 = vmul.f32 %v439, %v447
    %v471 = vmul.f32 %v440, %v447
    %v472 = vmul.f32 %v441, %v447
    %v473 = vld [vmem:[%s4] sm:$0x1]
    %v475 = vlaneseq
    %v476 = vshrl.u32 %v475, 7
    %v477 = vsub.s32 0, %v476
    %v478 = vrot.slane %v473, %v477
    %v480 = vadd.f32 %v449, %v478
    %v481 = vadd.f32 %v450, %v478
    %v482 = vadd.f32 %v451, %v478
    %v483 = vadd.f32 %v452, %v478
    %v484 = vadd.f32 %v453, %v478
    %v485 = vadd.f32 %v454, %v478
    %v486 = vadd.f32 %v455, %v478
    %v487 = vadd.f32 %v456, %v478
    %v488 = vadd.f32 %v457, %v478
    %v489 = vadd.f32 %v458, %v478
    %v490 = vadd.f32 %v459, %v478
    %v491 = vadd.f32 %v460, %v478
    %v492 = vadd.f32 %v461, %v478
    %v493 = vadd.f32 %v462, %v478
    %v494 = vadd.f32 %v463, %v478
    %v495 = vadd.f32 %v464, %v478
    %v496 = vadd.f32 %v465, %v478
    %v497 = vadd.f32 %v466, %v478
    %v498 = vadd.f32 %v467, %v478
    %v499 = vadd.f32 %v468, %v478
    %v500 = vadd.f32 %v469, %v478
    %v501 = vadd.f32 %v470, %v478
    %v502 = vadd.f32 %v471, %v478
    %v503 = vadd.f32 %v472, %v478
    %v504 = vld [vmem:[#allocation8] sm:$0xff]
    %v505 = vld [vmem:[#allocation8 + $0x8] sm:$0xff]
    %v506 = vld [vmem:[#allocation8 + $0x10] sm:$0xff]
    %v507 = vld [vmem:[#allocation8 + $0x18] sm:$0xff]
    %v508 = vld [vmem:[%s6] sm:$0x1]
    %v510 = vlaneseq
    %v511 = vshrl.u32 %v510, 7
    %v512 = vsub.s32 0, %v511
    %v513 = vrot.slane %v508, %v512
    %v516 = vsel %vm128, %v480, 0
    %v519 = vsel %vm128, %v481, 0
    %v522 = vsel %vm128, %v482, 0
    %v525 = vsel %vm128, %v483, 0
    %v528 = vsel %vm128, %v484, 0
    %v531 = vsel %vm128, %v485, 0
    %v534 = vsel %vm128, %v486, 0
    %v537 = vsel %vm128, %v487, 0
    %v540 = vsel %vm128, %v488, 0
    %v543 = vsel %vm128, %v489, 0
    %v546 = vsel %vm128, %v490, 0
    %v549 = vsel %vm128, %v491, 0
    %v552 = vsel %vm128, %v492, 0
    %v555 = vsel %vm128, %v493, 0
    %v558 = vsel %vm128, %v494, 0
    %v561 = vsel %vm128, %v495, 0
    %v564 = vsel %vm128, %v496, 0
    %v567 = vsel %vm128, %v497, 0
    %v570 = vsel %vm128, %v498, 0
    %v573 = vsel %vm128, %v499, 0
    %v576 = vsel %vm128, %v500, 0
    %v579 = vsel %vm128, %v501, 0
    %v582 = vsel %vm128, %v502, 0
    %v585 = vsel %vm128, %v503, 0
    %587 = vmatprep.subr.mxu0 0.0
    %588 = vmatpush1.msra.mxu0 %v504
    %589 = vmatprep.subr.mxu0 0.0
    %590 = vmatpush1.msra.mxu0 %v505
    %591 = vmatprep.subr.mxu0 0.0
    %592 = vmatpush1.msra.mxu0 %v506
    %593 = vmatprep.subr.mxu0 0.0
    %594 = vmatpush1.msra.mxu0 %v507
    %595 = vmatprep.subr.mxu0 0.0
    %596 = vmatpush1.msra.mxu0 0.0
    %597 = vmatprep.subr.mxu0 0.0
    %598 = vmatpush1.msra.mxu0 0.0
    %599 = vmatprep.subr.mxu0 0.0
    %600 = vmatpush1.msra.mxu0 0.0
    %601 = vmatprep.subr.mxu0 0.0
    %602 = vmatpush1.msra.mxu0 0.0
    %603 = vmatprep.subr.mxu0 0.0
    %604 = vmatpush1.msra.mxu0 0.0
    %605 = vmatprep.subr.mxu0 0.0
    %606 = vmatpush1.msra.mxu0 0.0
    %607 = vmatprep.subr.mxu0 0.0
    %608 = vmatpush1.msra.mxu0 0.0
    %609 = vmatprep.subr.mxu0 0.0
    %610 = vmatpush1.msra.mxu0 0.0
    %611 = vmatprep.subr.mxu0 0.0
    %612 = vmatpush1.msra.mxu0 0.0
    %613 = vmatprep.subr.mxu0 0.0
    %614 = vmatpush1.msra.mxu0 0.0
    %615 = vmatprep.subr.mxu0 0.0
    %616 = vmatpush1.msra.mxu0 0.0
    %617 = vmatprep.subr.mxu0 0.0
    %618 = vmatpush1.msra.mxu0 0.0
    %619 = vmatprep.subr.mxu0 0.0
    %620 = vmatpush1.msra.mxu0 0.0
    %621 = vmatprep.subr.mxu0 0.0
    %622 = vmatpush1.msra.mxu0 0.0
    %623 = vmatprep.subr.mxu0 0.0
    %624 = vmatpush1.msra.mxu0 0.0
    %625 = vmatprep.subr.mxu0 0.0
    %626 = vmatpush1.msra.mxu0 0.0
    %627 = vmatprep.subr.mxu0 0.0
    %628 = vmatpush1.msra.mxu0 0.0
    %629 = vmatprep.subr.mxu0 0.0
    %630 = vmatpush1.msra.mxu0 0.0
    %631 = vmatprep.subr.mxu0 0.0
    %632 = vmatpush1.msra.mxu0 0.0
    %633 = vmatprep.subr.mxu0 0.0
    %634 = vmatpush1.msra.mxu0 0.0
    %635 = vmatprep.subr.mxu0 0.0
    %636 = vmatpush1.msra.mxu0 0.0
    %637 = vmatprep.subr.mxu0 0.0
    %638 = vmatpush1.msra.mxu0 0.0
    %639 = vmatprep.subr.mxu0 0.0
    %640 = vmatpush1.msra.mxu0 0.0
    %641 = vmatprep.subr.mxu0 0.0
    %642 = vmatpush1.msra.mxu0 0.0
    %643 = vmatprep.subr.mxu0 0.0
    %644 = vmatpush1.msra.mxu0 0.0
    %645 = vmatprep.subr.mxu0 0.0
    %646 = vmatpush1.msra.mxu0 0.0
    %647 = vmatprep.subr.mxu0 0.0
    %648 = vmatpush1.msra.mxu0 0.0
    %649 = vmatprep.subr.mxu0 0.0
    %650 = vmatpush1.msra.mxu0 0.0
    %651 = vmatprep.mubr.f32.mxu0 0.0
    %652 = vmatmul.mubr.f32.gmra.mrb[0].mxu0 %v516
    %v653 = vpop.f32.mrb[0].mxu0
    %v654 = vadd.f32 %v513, %v653
    %v655 = vpop.f32.mrb[0].mxu0
    %656 = vmatprep.mubr.f32.mxu0 0.0
    %657 = vmatmul.mubr.f32.gmra.mrb[0].mxu0 %v519
    %v658 = vpop.f32.mrb[0].mxu0
    %v659 = vadd.f32 %v513, %v658
    %v660 = vpop.f32.mrb[0].mxu0
    %661 = vmatprep.mubr.f32.mxu0 0.0
    %662 = vmatmul.mubr.f32.gmra.mrb[0].mxu0 %v522
    %v663 = vpop.f32.mrb[0].mxu0
    %v664 = vadd.f32 %v513, %v663
    %v665 = vpop.f32.mrb[0].mxu0
    %666 = vmatprep.mubr.f32.mxu0 0.0
    %667 = vmatmul.mubr.f32.gmra.mrb[0].mxu0 %v525
    %v668 = vpop.f32.mrb[0].mxu0
    %v669 = vadd.f32 %v513, %v668
    %v670 = vpop.f32.mrb[0].mxu0
    %671 = vmatprep.mubr.f32.mxu0 0.0
    %672 = vmatmul.mubr.f32.gmra.mrb[0].mxu0 %v528
    %v673 = vpop.f32.mrb[0].mxu0
    %v674 = vadd.f32 %v513, %v673
    %v675 = vpop.f32.mrb[0].mxu0
    %676 = vmatprep.mubr.f32.mxu0 0.0
    %677 = vmatmul.mubr.f32.gmra.mrb[0].mxu0 %v531
    %v678 = vpop.f32.mrb[0].mxu0
    %v679 = vadd.f32 %v513, %v678
    %v680 = vpop.f32.mrb[0].mxu0
    %681 = vmatprep.mubr.f32.mxu0 0.0
    %682 = vmatmul.mubr.f32.gmra.mrb[0].mxu0 %v534
    %v683 = vpop.f32.mrb[0].mxu0
    %v684 = vadd.f32 %v513, %v683
    %v685 = vpop.f32.mrb[0].mxu0
    %686 = vmatprep.mubr.f32.mxu0 0.0
    %687 = vmatmul.mubr.f32.gmra.mrb[0].mxu0 %v537
    %v688 = vpop.f32.mrb[0].mxu0
    %v689 = vadd.f32 %v513, %v688
    %v690 = vpop.f32.mrb[0].mxu0
    %691 = vmatprep.mubr.f32.mxu0 0.0
    %692 = vmatmul.mubr.f32.gmra.mrb[0].mxu0 %v540
    %v693 = vpop.f32.mrb[0].mxu0
    %v694 = vadd.f32 %v513, %v693
    %v695 = vpop.f32.mrb[0].mxu0
    %696 = vmatprep.mubr.f32.mxu0 0.0
    %697 = vmatmul.mubr.f32.gmra.mrb[0].mxu0 %v543
    %v698 = vpop.f32.mrb[0].mxu0
    %v699 = vadd.f32 %v513, %v698
    %v700 = vpop.f32.mrb[0].mxu0
    %701 = vmatprep.mubr.f32.mxu0 0.0
    %702 = vmatmul.mubr.f32.gmra.mrb[0].mxu0 %v546
    %v703 = vpop.f32.mrb[0].mxu0
    %v704 = vadd.f32 %v513, %v703
    %v705 = vpop.f32.mrb[0].mxu0
    %706 = vmatprep.mubr.f32.mxu0 0.0
    %707 = vmatmul.mubr.f32.gmra.mrb[0].mxu0 %v549
    %v708 = vpop.f32.mrb[0].mxu0
    %v709 = vadd.f32 %v513, %v708
    %v710 = vpop.f32.mrb[0].mxu0
    %711 = vmatprep.mubr.f32.mxu0 0.0
    %712 = vmatmul.mubr.f32.gmra.mrb[0].mxu0 %v552
    %v713 = vpop.f32.mrb[0].mxu0
    %v714 = vadd.f32 %v513, %v713
    %v715 = vpop.f32.mrb[0].mxu0
    %716 = vmatprep.mubr.f32.mxu0 0.0
    %717 = vmatmul.mubr.f32.gmra.mrb[0].mxu0 %v555
    %v718 = vpop.f32.mrb[0].mxu0
    %v719 = vadd.f32 %v513, %v718
    %v720 = vpop.f32.mrb[0].mxu0
    %721 = vmatprep.mubr.f32.mxu0 0.0
    %722 = vmatmul.mubr.f32.gmra.mrb[0].mxu0 %v558
    %v723 = vpop.f32.mrb[0].mxu0
    %v724 = vadd.f32 %v513, %v723
    %v725 = vpop.f32.mrb[0].mxu0
    %726 = vmatprep.mubr.f32.mxu0 0.0
    %727 = vmatmul.mubr.f32.gmra.mrb[0].mxu0 %v561
    %v728 = vpop.f32.mrb[0].mxu0
    %v729 = vadd.f32 %v513, %v728
    %v730 = vpop.f32.mrb[0].mxu0
    %731 = vmatprep.mubr.f32.mxu0 0.0
    %732 = vmatmul.mubr.f32.gmra.mrb[0].mxu0 %v564
    %v733 = vpop.f32.mrb[0].mxu0
    %v734 = vadd.f32 %v513, %v733
    %v735 = vpop.f32.mrb[0].mxu0
    %736 = vmatprep.mubr.f32.mxu0 0.0
    %737 = vmatmul.mubr.f32.gmra.mrb[0].mxu0 %v567
    %v738 = vpop.f32.mrb[0].mxu0
    %v739 = vadd.f32 %v513, %v738
    %v740 = vpop.f32.mrb[0].mxu0
    %741 = vmatprep.mubr.f32.mxu0 0.0
    %742 = vmatmul.mubr.f32.gmra.mrb[0].mxu0 %v570
    %v743 = vpop.f32.mrb[0].mxu0
    %v744 = vadd.f32 %v513, %v743
    %v745 = vpop.f32.mrb[0].mxu0
    %746 = vmatprep.mubr.f32.mxu0 0.0
    %747 = vmatmul.mubr.f32.gmra.mrb[0].mxu0 %v573
    %v748 = vpop.f32.mrb[0].mxu0
    %v749 = vadd.f32 %v513, %v748
    %v750 = vpop.f32.mrb[0].mxu0
    %751 = vmatprep.mubr.f32.mxu0 0.0
    %752 = vmatmul.mubr.f32.gmra.mrb[0].mxu0 %v576
    %v753 = vpop.f32.mrb[0].mxu0
    %v754 = vadd.f32 %v513, %v753
    %v755 = vpop.f32.mrb[0].mxu0
    %756 = vmatprep.mubr.f32.mxu0 0.0
    %757 = vmatmul.mubr.f32.gmra.mrb[0].mxu0 %v579
    %v758 = vpop.f32.mrb[0].mxu0
    %v759 = vadd.f32 %v513, %v758
    %v760 = vpop.f32.mrb[0].mxu0
    %761 = vmatprep.mubr.f32.mxu0 0.0
    %762 = vmatmul.mubr.f32.gmra.mrb[0].mxu0 %v582
    %v763 = vpop.f32.mrb[0].mxu0
    %v764 = vadd.f32 %v513, %v763
    %v765 = vpop.f32.mrb[0].mxu0
    %766 = vmatprep.mubr.f32.mxu0 0.0
    %767 = vmatmul.mubr.f32.gmra.mrb[0].mxu0 %v585
    %v768 = vpop.f32.mrb[0].mxu0
    %v769 = vadd.f32 %v513, %v768
    %v770 = vpop.f32.mrb[0].mxu0
    %771 = vdwg.mxu0
    %v772 = vmul.f32 %v654, 0.17677669
    %v773 = vmul.f32 %v659, 0.17677669
    %v774 = vmul.f32 %v664, 0.17677669
    %v775 = vmul.f32 %v669, 0.17677669
    %v776 = vmul.f32 %v674, 0.17677669
    %v777 = vmul.f32 %v679, 0.17677669
    %v778 = vmul.f32 %v684, 0.17677669
    %v779 = vmul.f32 %v689, 0.17677669
    %781 = vset.pattern.permute.xlu0 0
    %782 = vperm.xlu0 %781, %v772
    %v783 = vpop.permute.xlu0 %782
    %786 = vset.pattern.permute.xlu0 0
    %787 = vperm.xlu0 %786, %v773
    %v788 = vpop.permute.xlu0 %787
    %791 = vset.pattern.permute.xlu0 0
    %792 = vperm.xlu0 %791, %v774
    %v793 = vpop.permute.xlu0 %792
    %796 = vset.pattern.permute.xlu0 0
    %797 = vperm.xlu0 %796, %v775
    %v798 = vpop.permute.xlu0 %797
    %801 = vset.pattern.permute.xlu0 0
    %802 = vperm.xlu0 %801, %v776
    %v803 = vpop.permute.xlu0 %802
    %806 = vset.pattern.permute.xlu0 0
    %807 = vperm.xlu0 %806, %v777
    %v808 = vpop.permute.xlu0 %807
    %811 = vset.pattern.permute.xlu0 0
    %812 = vperm.xlu0 %811, %v778
    %v813 = vpop.permute.xlu0 %812
    %816 = vset.pattern.permute.xlu0 0
    %817 = vperm.xlu0 %816, %v779
    %v818 = vpop.permute.xlu0 %817
    %828 = vset.pattern.permute.xlu0 4
    %829 = vperm.xlu0 %828, %v694
    %v830 = vpop.permute.xlu0 %829
    %831 = vset.pattern.permute.xlu0 4
    %832 = vperm.xlu0 %831, %v699
    %v833 = vpop.permute.xlu0 %832
    %834 = vset.pattern.permute.xlu0 4
    %835 = vperm.xlu0 %834, %v704
    %v836 = vpop.permute.xlu0 %835
    %837 = vset.pattern.permute.xlu0 4
    %838 = vperm.xlu0 %837, %v709
    %v839 = vpop.permute.xlu0 %838
    %840 = vset.pattern.permute.xlu0 4
    %841 = vperm.xlu0 %840, %v714
    %v842 = vpop.permute.xlu0 %841
    %843 = vset.pattern.permute.xlu0 4
    %844 = vperm.xlu0 %843, %v719
    %v845 = vpop.permute.xlu0 %844
    %846 = vset.pattern.permute.xlu0 4
    %847 = vperm.xlu0 %846, %v724
    %v848 = vpop.permute.xlu0 %847
    %849 = vset.pattern.permute.xlu0 4
    %850 = vperm.xlu0 %849, %v729
    %v851 = vpop.permute.xlu0 %850
    %v852 = vlaneseq
    %v853 = vand.u32 %v852, 127
    %v854 = vlaneseq
    %v855 = vshrl.u32 %v854, 7
    %v856 = vsub.s32 %v853, %v855
    %v857 = vrot.slane %v830, %v856
    %v858 = vlaneseq
    %v859 = vshrl.u32 %v858, 7
    %v860 = vsub.s32 %v853, %v859
    %v861 = vrot.slane %v833, %v860
    %v862 = vlaneseq
    %v863 = vshrl.u32 %v862, 7
    %v864 = vsub.s32 %v853, %v863
    %v865 = vrot.slane %v836, %v864
    %v866 = vlaneseq
    %v867 = vshrl.u32 %v866, 7
    %v868 = vsub.s32 %v853, %v867
    %v869 = vrot.slane %v839, %v868
    %v870 = vlaneseq
    %v871 = vshrl.u32 %v870, 7
    %v872 = vsub.s32 %v853, %v871
    %v873 = vrot.slane %v842, %v872
    %v874 = vlaneseq
    %v875 = vshrl.u32 %v874, 7
    %v876 = vsub.s32 %v853, %v875
    %v877 = vrot.slane %v845, %v876
    %v878 = vlaneseq
    %v879 = vshrl.u32 %v878, 7
    %v880 = vsub.s32 %v853, %v879
    %v881 = vrot.slane %v848, %v880
    %v882 = vlaneseq
    %v883 = vshrl.u32 %v882, 7
    %v884 = vsub.s32 %v853, %v883
    %v885 = vrot.slane %v851, %v884
    %vm886 = vcmask 1042434
    %v887 = vsel %vm886, %v857, %v857
    %vm888 = vcmask 1043459
    %v889 = vsel %vm888, %v857, %v887
    %vm890 = vcmask 1044484
    %v891 = vsel %vm890, %v857, %v889
    %vm892 = vcmask 1045509
    %v893 = vsel %vm892, %v857, %v891
    %vm894 = vcmask 1046534
    %v895 = vsel %vm894, %v857, %v893
    %vm896 = vcmask 1047559
    %v897 = vsel %vm896, %v857, %v895
    %v898 = vsel %vm886, %v861, %v861
    %v899 = vsel %vm888, %v861, %v898
    %v900 = vsel %vm890, %v861, %v899
    %v901 = vsel %vm892, %v861, %v900
    %v902 = vsel %vm894, %v861, %v901
    %v903 = vsel %vm896, %v861, %v902
    %v904 = vsel %vm886, %v865, %v865
    %v905 = vsel %vm888, %v865, %v904
    %v906 = vsel %vm890, %v865, %v905
    %v907 = vsel %vm892, %v865, %v906
    %v908 = vsel %vm894, %v865, %v907
    %v909 = vsel %vm896, %v865, %v908
    %v910 = vsel %vm886, %v869, %v869
    %v911 = vsel %vm888, %v869, %v910
    %v912 = vsel %vm890, %v869, %v911
    %v913 = vsel %vm892, %v869, %v912
    %v914 = vsel %vm894, %v869, %v913
    %v915 = vsel %vm896, %v869, %v914
    %v916 = vsel %vm886, %v873, %v873
    %v917 = vsel %vm888, %v873, %v916
    %v918 = vsel %vm890, %v873, %v917
    %v919 = vsel %vm892, %v873, %v918
    %v920 = vsel %vm894, %v873, %v919
    %v921 = vsel %vm896, %v873, %v920
    %v922 = vsel %vm886, %v877, %v877
    %v923 = vsel %vm888, %v877, %v922
    %v924 = vsel %vm890, %v877, %v923
    %v925 = vsel %vm892, %v877, %v924
    %v926 = vsel %vm894, %v877, %v925
    %v927 = vsel %vm896, %v877, %v926
    %v928 = vsel %vm886, %v881, %v881
    %v929 = vsel %vm888, %v881, %v928
    %v930 = vsel %vm890, %v881, %v929
    %v931 = vsel %vm892, %v881, %v930
    %v932 = vsel %vm894, %v881, %v931
    %v933 = vsel %vm896, %v881, %v932
    %v934 = vsel %vm886, %v885, %v885
    %v935 = vsel %vm888, %v885, %v934
    %v936 = vsel %vm890, %v885, %v935
    %v937 = vsel %vm892, %v885, %v936
    %v938 = vsel %vm894, %v885, %v937
    %v939 = vsel %vm896, %v885, %v938
    %v948 = vmul.f32 %v783, %v897
    %v949 = vmul.f32 %v788, %v903
    %v950 = vmul.f32 %v793, %v909
    %v951 = vmul.f32 %v798, %v915
    %v952 = vmul.f32 %v803, %v921
    %v953 = vmul.f32 %v808, %v927
    %v954 = vmul.f32 %v813, %v933
    %v955 = vmul.f32 %v818, %v939
    %vm956 = vcmask 64512
    %v957 = vsel %vm956, %v948, -inf
    %958 = vmax.xlane.f32.xlu0 %v957
    %v959 = vpop.xlane.xlu0 %958
    %v960 = vsel %vm956, %v949, -inf
    %961 = vmax.xlane.f32.xlu0 %v960
    %v962 = vpop.xlane.xlu0 %961
    %v963 = vsel %vm956, %v950, -inf
    %964 = vmax.xlane.f32.xlu0 %v963
    %v965 = vpop.xlane.xlu0 %964
    %v966 = vsel %vm956, %v951, -inf
    %967 = vmax.xlane.f32.xlu0 %v966
    %v968 = vpop.xlane.xlu0 %967
    %v969 = vsel %vm956, %v952, -inf
    %970 = vmax.xlane.f32.xlu0 %v969
    %v971 = vpop.xlane.xlu0 %970
    %v972 = vsel %vm956, %v953, -inf
    %973 = vmax.xlane.f32.xlu0 %v972
    %v974 = vpop.xlane.xlu0 %973
    %v975 = vsel %vm956, %v954, -inf
    %976 = vmax.xlane.f32.xlu0 %v975
    %v977 = vpop.xlane.xlu0 %976
    %v978 = vsel %vm956, %v955, -inf
    %979 = vmax.xlane.f32.xlu0 %v978
    %v980 = vpop.xlane.xlu0 %979
    %v981 = vsub.f32 %v948, %v959
    %v982 = vsub.f32 %v949, %v962
    %v983 = vsub.f32 %v950, %v965
    %v984 = vsub.f32 %v951, %v968
    %v985 = vsub.f32 %v952, %v971
    %v986 = vsub.f32 %v953, %v974
    %v987 = vsub.f32 %v954, %v977
    %v988 = vsub.f32 %v955, %v980
    %v989 = vmul.f32 %v981, 1.442695
    %v990 = vpow.pop %v989
    %v991 = vmul.f32 %v982, 1.442695
    %v992 = vpow.pop %v991
    %v993 = vmul.f32 %v983, 1.442695
    %v994 = vpow.pop %v993
    %v995 = vmul.f32 %v984, 1.442695
    %v996 = vpow.pop %v995
    %v997 = vmul.f32 %v985, 1.442695
    %v998 = vpow.pop %v997
    %v999 = vmul.f32 %v986, 1.442695
    %v1000 = vpow.pop %v999
    %v1001 = vmul.f32 %v987, 1.442695
    %v1002 = vpow.pop %v1001
    %v1003 = vmul.f32 %v988, 1.442695
    %v1004 = vpow.pop %v1003
    %v1005 = vsel %vm956, %v990, 0.0
    %1006 = vadd.xlane.f32.xlu0 %v1005
    %v1007 = vpop.xlane.xlu0 %1006
    %v1008 = vsel %vm956, %v992, 0.0
    %1009 = vadd.xlane.f32.xlu0 %v1008
    %v1010 = vpop.xlane.xlu0 %1009
    %v1011 = vsel %vm956, %v994, 0.0
    %1012 = vadd.xlane.f32.xlu0 %v1011
    %v1013 = vpop.xlane.xlu0 %1012
    %v1014 = vsel %vm956, %v996, 0.0
    %1015 = vadd.xlane.f32.xlu0 %v1014
    %v1016 = vpop.xlane.xlu0 %1015
    %v1017 = vsel %vm956, %v998, 0.0
    %1018 = vadd.xlane.f32.xlu0 %v1017
    %v1019 = vpop.xlane.xlu0 %1018
    %v1020 = vsel %vm956, %v1000, 0.0
    %1021 = vadd.xlane.f32.xlu0 %v1020
    %v1022 = vpop.xlane.xlu0 %1021
    %v1023 = vsel %vm956, %v1002, 0.0
    %1024 = vadd.xlane.f32.xlu0 %v1023
    %v1025 = vpop.xlane.xlu0 %1024
    %v1026 = vsel %vm956, %v1004, 0.0
    %1027 = vadd.xlane.f32.xlu0 %v1026
    %v1028 = vpop.xlane.xlu0 %1027
    %v1029 = vrcp.pop %v1007
    %v1030 = vmul.f32 0.25, %v1029
    %v1031 = vrcp.pop %v1010
    %v1032 = vmul.f32 0.25, %v1031
    %v1033 = vrcp.pop %v1013
    %v1034 = vmul.f32 0.25, %v1033
    %v1035 = vrcp.pop %v1016
    %v1036 = vmul.f32 0.25, %v1035
    %v1037 = vrcp.pop %v1019
    %v1038 = vmul.f32 0.25, %v1037
    %v1039 = vrcp.pop %v1022
    %v1040 = vmul.f32 0.25, %v1039
    %v1041 = vrcp.pop %v1025
    %v1042 = vmul.f32 0.25, %v1041
    %v1043 = vrcp.pop %v1028
    %v1044 = vmul.f32 0.25, %v1043
    %v1045 = vmul.f32 %v990, %v1030
    %v1046 = vmul.f32 %v992, %v1032
    %v1047 = vmul.f32 %v994, %v1034
    %v1048 = vmul.f32 %v996, %v1036
    %v1049 = vmul.f32 %v998, %v1038
    %v1050 = vmul.f32 %v1000, %v1040
    %v1051 = vmul.f32 %v1002, %v1042
    %v1052 = vmul.f32 %v1004, %v1044
    %v1053 = vadd.f32 %v1045, 0.0
    %v1054 = vadd.f32 %v1046, 0.0
    %v1055 = vadd.f32 %v1047, 0.0
    %v1056 = vadd.f32 %v1048, 0.0
    %v1057 = vadd.f32 %v1049, 0.0
    %v1058 = vadd.f32 %v1050, 0.0
    %v1059 = vadd.f32 %v1051, 0.0
    %v1060 = vadd.f32 %v1052, 0.0
    %1061 = vset.pattern.permute.xlu0 1
    %1062 = vperm.xlu0 %1061, %v772
    %v1063 = vpop.permute.xlu0 %1062
    %1065 = vset.pattern.permute.xlu0 1
    %1066 = vperm.xlu0 %1065, %v773
    %v1067 = vpop.permute.xlu0 %1066
    %1069 = vset.pattern.permute.xlu0 1
    %1070 = vperm.xlu0 %1069, %v774
    %v1071 = vpop.permute.xlu0 %1070
    %1073 = vset.pattern.permute.xlu0 1
    %1074 = vperm.xlu0 %1073, %v775
    %v1075 = vpop.permute.xlu0 %1074
    %1077 = vset.pattern.permute.xlu0 1
    %1078 = vperm.xlu0 %1077, %v776
    %v1079 = vpop.permute.xlu0 %1078
    %1081 = vset.pattern.permute.xlu0 1
    %1082 = vperm.xlu0 %1081, %v777
    %v1083 = vpop.permute.xlu0 %1082
    %1085 = vset.pattern.permute.xlu0 1
    %1086 = vperm.xlu0 %1085, %v778
    %v1087 = vpop.permute.xlu0 %1086
    %1089 = vset.pattern.permute.xlu0 1
    %1090 = vperm.xlu0 %1089, %v779
    %v1091 = vpop.permute.xlu0 %1090
    %1093 = vset.pattern.permute.xlu0 5
    %1094 = vperm.xlu0 %1093, %v694
    %v1095 = vpop.permute.xlu0 %1094
    %1096 = vset.pattern.permute.xlu0 5
    %1097 = vperm.xlu0 %1096, %v699
    %v1098 = vpop.permute.xlu0 %1097
    %1099 = vset.pattern.permute.xlu0 5
    %1100 = vperm.xlu0 %1099, %v704
    %v1101 = vpop.permute.xlu0 %1100
    %1102 = vset.pattern.permute.xlu0 5
    %1103 = vperm.xlu0 %1102, %v709
    %v1104 = vpop.permute.xlu0 %1103
    %1105 = vset.pattern.permute.xlu0 5
    %1106 = vperm.xlu0 %1105, %v714
    %v1107 = vpop.permute.xlu0 %1106
    %1108 = vset.pattern.permute.xlu0 5
    %1109 = vperm.xlu0 %1108, %v719
    %v1110 = vpop.permute.xlu0 %1109
    %1111 = vset.pattern.permute.xlu0 5
    %1112 = vperm.xlu0 %1111, %v724
    %v1113 = vpop.permute.xlu0 %1112
    %1114 = vset.pattern.permute.xlu0 5
    %1115 = vperm.xlu0 %1114, %v729
    %v1116 = vpop.permute.xlu0 %1115
    %v1117 = vlaneseq
    %v1118 = vshrl.u32 %v1117, 7
    %v1119 = vsub.s32 %v853, %v1118
    %v1120 = vrot.slane %v1095, %v1119
    %v1121 = vlaneseq
    %v1122 = vshrl.u32 %v1121, 7
    %v1123 = vsub.s32 %v853, %v1122
    %v1124 = vrot.slane %v1098, %v1123
    %v1125 = vlaneseq
    %v1126 = vshrl.u32 %v1125, 7
    %v1127 = vsub.s32 %v853, %v1126
    %v1128 = vrot.slane %v1101, %v1127
    %v1129 = vlaneseq
    %v1130 = vshrl.u32 %v1129, 7
    %v1131 = vsub.s32 %v853, %v1130
    %v1132 = vrot.slane %v1104, %v1131
    %v1133 = vlaneseq
    %v1134 = vshrl.u32 %v1133, 7
    %v1135 = vsub.s32 %v853, %v1134
    %v1136 = vrot.slane %v1107, %v1135
    %v1137 = vlaneseq
    %v1138 = vshrl.u32 %v1137, 7
    %v1139 = vsub.s32 %v853, %v1138
    %v1140 = vrot.slane %v1110, %v1139
    %v1141 = vlaneseq
    %v1142 = vshrl.u32 %v1141, 7
    %v1143 = vsub.s32 %v853, %v1142
    %v1144 = vrot.slane %v1113, %v1143
    %v1145 = vlaneseq
    %v1146 = vshrl.u32 %v1145, 7
    %v1147 = vsub.s32 %v853, %v1146
    %v1148 = vrot.slane %v1116, %v1147
    %v1149 = vsel %vm886, %v1120, %v1120
    %v1150 = vsel %vm888, %v1120, %v1149
    %v1151 = vsel %vm890, %v1120, %v1150
    %v1152 = vsel %vm892, %v1120, %v1151
    %v1153 = vsel %vm894, %v1120, %v1152
    %v1154 = vsel %vm896, %v1120, %v1153
    %v1155 = vsel %vm886, %v1124, %v1124
    %v1156 = vsel %vm888, %v1124, %v1155
    %v1157 = vsel %vm890, %v1124, %v1156
    %v1158 = vsel %vm892, %v1124, %v1157
    %v1159 = vsel %vm894, %v1124, %v1158
    %v1160 = vsel %vm896, %v1124, %v1159
    %v1161 = vsel %vm886, %v1128, %v1128
    %v1162 = vsel %vm888, %v1128, %v1161
    %v1163 = vsel %vm890, %v1128, %v1162
    %v1164 = vsel %vm892, %v1128, %v1163
    %v1165 = vsel %vm894, %v1128, %v1164
    %v1166 = vsel %vm896, %v1128, %v1165
    %v1167 = vsel %vm886, %v1132, %v1132
    %v1168 = vsel %vm888, %v1132, %v1167
    %v1169 = vsel %vm890, %v1132, %v1168
    %v1170 = vsel %vm892, %v1132, %v1169
    %v1171 = vsel %vm894, %v1132, %v1170
    %v1172 = vsel %vm896, %v1132, %v1171
    %v1173 = vsel %vm886, %v1136, %v1136
    %v1174 = vsel %vm888, %v1136, %v1173
    %v1175 = vsel %vm890, %v1136, %v1174
    %v1176 = vsel %vm892, %v1136, %v1175
    %v1177 = vsel %vm894, %v1136, %v1176
    %v1178 = vsel %vm896, %v1136, %v1177
    %v1179 = vsel %vm886, %v1140, %v1140
    %v1180 = vsel %vm888, %v1140, %v1179
    %v1181 = vsel %vm890, %v1140, %v1180
    %v1182 = vsel %vm892, %v1140, %v1181
    %v1183 = vsel %vm894, %v1140, %v1182
    %v1184 = vsel %vm896, %v1140, %v1183
    %v1185 = vsel %vm886, %v1144, %v1144
    %v1186 = vsel %vm888, %v1144, %v1185
    %v1187 = vsel %vm890, %v1144, %v1186
    %v1188 = vsel %vm892, %v1144, %v1187
    %v1189 = vsel %vm894, %v1144, %v1188
    %v1190 = vsel %vm896, %v1144, %v1189
    %v1191 = vsel %vm886, %v1148, %v1148
    %v1192 = vsel %vm888, %v1148, %v1191
    %v1193 = vsel %vm890, %v1148, %v1192
    %v1194 = vsel %vm892, %v1148, %v1193
    %v1195 = vsel %vm894, %v1148, %v1194
    %v1196 = vsel %vm896, %v1148, %v1195
    %v1205 = vmul.f32 %v1063, %v1154
    %v1206 = vmul.f32 %v1067, %v1160
    %v1207 = vmul.f32 %v1071, %v1166
    %v1208 = vmul.f32 %v1075, %v1172
    %v1209 = vmul.f32 %v1079, %v1178
    %v1210 = vmul.f32 %v1083, %v1184
    %v1211 = vmul.f32 %v1087, %v1190
    %v1212 = vmul.f32 %v1091, %v1196
    %v1213 = vsel %vm956, %v1205, -inf
    %1214 = vmax.xlane.f32.xlu0 %v1213
    %v1215 = vpop.xlane.xlu0 %1214
    %v1216 = vsel %vm956, %v1206, -inf
    %1217 = vmax.xlane.f32.xlu0 %v1216
    %v1218 = vpop.xlane.xlu0 %1217
    %v1219 = vsel %vm956, %v1207, -inf
    %1220 = vmax.xlane.f32.xlu0 %v1219
    %v1221 = vpop.xlane.xlu0 %1220
    %v1222 = vsel %vm956, %v1208, -inf
    %1223 = vmax.xlane.f32.xlu0 %v1222
    %v1224 = vpop.xlane.xlu0 %1223
    %v1225 = vsel %vm956, %v1209, -inf
    %1226 = vmax.xlane.f32.xlu0 %v1225
    %v1227 = vpop.xlane.xlu0 %1226
    %v1228 = vsel %vm956, %v1210, -inf
    %1229 = vmax.xlane.f32.xlu0 %v1228
    %v1230 = vpop.xlane.xlu0 %1229
    %v1231 = vsel %vm956, %v1211, -inf
    %1232 = vmax.xlane.f32.xlu0 %v1231
    %v1233 = vpop.xlane.xlu0 %1232
    %v1234 = vsel %vm956, %v1212, -inf
    %1235 = vmax.xlane.f32.xlu0 %v1234
    %v1236 = vpop.xlane.xlu0 %1235
    %v1237 = vsub.f32 %v1205, %v1215
    %v1238 = vsub.f32 %v1206, %v1218
    %v1239 = vsub.f32 %v1207, %v1221
    %v1240 = vsub.f32 %v1208, %v1224
    %v1241 = vsub.f32 %v1209, %v1227
    %v1242 = vsub.f32 %v1210, %v1230
    %v1243 = vsub.f32 %v1211, %v1233
    %v1244 = vsub.f32 %v1212, %v1236
    %v1245 = vmul.f32 %v1237, 1.442695
    %v1246 = vpow.pop %v1245
    %v1247 = vmul.f32 %v1238, 1.442695
    %v1248 = vpow.pop %v1247
    %v1249 = vmul.f32 %v1239, 1.442695
    %v1250 = vpow.pop %v1249
    %v1251 = vmul.f32 %v1240, 1.442695
    %v1252 = vpow.pop %v1251
    %v1253 = vmul.f32 %v1241, 1.442695
    %v1254 = vpow.pop %v1253
    %v1255 = vmul.f32 %v1242, 1.442695
    %v1256 = vpow.pop %v1255
    %v1257 = vmul.f32 %v1243, 1.442695
    %v1258 = vpow.pop %v1257
    %v1259 = vmul.f32 %v1244, 1.442695
    %v1260 = vpow.pop %v1259
    %v1261 = vsel %vm956, %v1246, 0.0
    %1262 = vadd.xlane.f32.xlu0 %v1261
    %v1263 = vpop.xlane.xlu0 %1262
    %v1264 = vsel %vm956, %v1248, 0.0
    %1265 = vadd.xlane.f32.xlu0 %v1264
    %v1266 = vpop.xlane.xlu0 %1265
    %v1267 = vsel %vm956, %v1250, 0.0
    %1268 = vadd.xlane.f32.xlu0 %v1267
    %v1269 = vpop.xlane.xlu0 %1268
    %v1270 = vsel %vm956, %v1252, 0.0
    %1271 = vadd.xlane.f32.xlu0 %v1270
    %v1272 = vpop.xlane.xlu0 %1271
    %v1273 = vsel %vm956, %v1254, 0.0
    %1274 = vadd.xlane.f32.xlu0 %v1273
    %v1275 = vpop.xlane.xlu0 %1274
    %v1276 = vsel %vm956, %v1256, 0.0
    %1277 = vadd.xlane.f32.xlu0 %v1276
    %v1278 = vpop.xlane.xlu0 %1277
    %v1279 = vsel %vm956, %v1258, 0.0
    %1280 = vadd.xlane.f32.xlu0 %v1279
    %v1281 = vpop.xlane.xlu0 %1280
    %v1282 = vsel %vm956, %v1260, 0.0
    %1283 = vadd.xlane.f32.xlu0 %v1282
    %v1284 = vpop.xlane.xlu0 %1283
    %v1285 = vrcp.pop %v1263
    %v1286 = vmul.f32 0.25, %v1285
    %v1287 = vrcp.pop %v1266
    %v1288 = vmul.f32 0.25, %v1287
    %v1289 = vrcp.pop %v1269
    %v1290 = vmul.f32 0.25, %v1289
    %v1291 = vrcp.pop %v1272
    %v1292 = vmul.f32 0.25, %v1291
    %v1293 = vrcp.pop %v1275
    %v1294 = vmul.f32 0.25, %v1293
    %v1295 = vrcp.pop %v1278
    %v1296 = vmul.f32 0.25, %v1295
    %v1297 = vrcp.pop %v1281
    %v1298 = vmul.f32 0.25, %v1297
    %v1299 = vrcp.pop %v1284
    %v1300 = vmul.f32 0.25, %v1299
    %v1301 = vmul.f32 %v1246, %v1286
    %v1302 = vmul.f32 %v1248, %v1288
    %v1303 = vmul.f32 %v1250, %v1290
    %v1304 = vmul.f32 %v1252, %v1292
    %v1305 = vmul.f32 %v1254, %v1294
    %v1306 = vmul.f32 %v1256, %v1296
    %v1307 = vmul.f32 %v1258, %v1298
    %v1308 = vmul.f32 %v1260, %v1300
    %v1309 = vadd.f32 %v1053, %v1301
    %v1310 = vadd.f32 %v1054, %v1302
    %v1311 = vadd.f32 %v1055, %v1303
    %v1312 = vadd.f32 %v1056, %v1304
    %v1313 = vadd.f32 %v1057, %v1305
    %v1314 = vadd.f32 %v1058, %v1306
    %v1315 = vadd.f32 %v1059, %v1307
    %v1316 = vadd.f32 %v1060, %v1308
    %1317 = vset.pattern.permute.xlu0 2
    %1318 = vperm.xlu0 %1317, %v772
    %v1319 = vpop.permute.xlu0 %1318
    %1321 = vset.pattern.permute.xlu0 2
    %1322 = vperm.xlu0 %1321, %v773
    %v1323 = vpop.permute.xlu0 %1322
    %1325 = vset.pattern.permute.xlu0 2
    %1326 = vperm.xlu0 %1325, %v774
    %v1327 = vpop.permute.xlu0 %1326
    %1329 = vset.pattern.permute.xlu0 2
    %1330 = vperm.xlu0 %1329, %v775
    %v1331 = vpop.permute.xlu0 %1330
    %1333 = vset.pattern.permute.xlu0 2
    %1334 = vperm.xlu0 %1333, %v776
    %v1335 = vpop.permute.xlu0 %1334
    %1337 = vset.pattern.permute.xlu0 2
    %1338 = vperm.xlu0 %1337, %v777
    %v1339 = vpop.permute.xlu0 %1338
    %1341 = vset.pattern.permute.xlu0 2
    %1342 = vperm.xlu0 %1341, %v778
    %v1343 = vpop.permute.xlu0 %1342
    %1345 = vset.pattern.permute.xlu0 2
    %1346 = vperm.xlu0 %1345, %v779
    %v1347 = vpop.permute.xlu0 %1346
    %1349 = vset.pattern.permute.xlu0 6
    %1350 = vperm.xlu0 %1349, %v694
    %v1351 = vpop.permute.xlu0 %1350
    %1352 = vset.pattern.permute.xlu0 6
    %1353 = vperm.xlu0 %1352, %v699
    %v1354 = vpop.permute.xlu0 %1353
    %1355 = vset.pattern.permute.xlu0 6
    %1356 = vperm.xlu0 %1355, %v704
    %v1357 = vpop.permute.xlu0 %1356
    %1358 = vset.pattern.permute.xlu0 6
    %1359 = vperm.xlu0 %1358, %v709
    %v1360 = vpop.permute.xlu0 %1359
    %1361 = vset.pattern.permute.xlu0 6
    %1362 = vperm.xlu0 %1361, %v714
    %v1363 = vpop.permute.xlu0 %1362
    %1364 = vset.pattern.permute.xlu0 6
    %1365 = vperm.xlu0 %1364, %v719
    %v1366 = vpop.permute.xlu0 %1365
    %1367 = vset.pattern.permute.xlu0 6
    %1368 = vperm.xlu0 %1367, %v724
    %v1369 = vpop.permute.xlu0 %1368
    %1370 = vset.pattern.permute.xlu0 6
    %1371 = vperm.xlu0 %1370, %v729
    %v1372 = vpop.permute.xlu0 %1371
    %v1373 = vlaneseq
    %v1374 = vshrl.u32 %v1373, 7
    %v1375 = vsub.s32 %v853, %v1374
    %v1376 = vrot.slane %v1351, %v1375
    %v1377 = vlaneseq
    %v1378 = vshrl.u32 %v1377, 7
    %v1379 = vsub.s32 %v853, %v1378
    %v1380 = vrot.slane %v1354, %v1379
    %v1381 = vlaneseq
    %v1382 = vshrl.u32 %v1381, 7
    %v1383 = vsub.s32 %v853, %v1382
    %v1384 = vrot.slane %v1357, %v1383
    %v1385 = vlaneseq
    %v1386 = vshrl.u32 %v1385, 7
    %v1387 = vsub.s32 %v853, %v1386
    %v1388 = vrot.slane %v1360, %v1387
    %v1389 = vlaneseq
    %v1390 = vshrl.u32 %v1389, 7
    %v1391 = vsub.s32 %v853, %v1390
    %v1392 = vrot.slane %v1363, %v1391
    %v1393 = vlaneseq
    %v1394 = vshrl.u32 %v1393, 7
    %v1395 = vsub.s32 %v853, %v1394
    %v1396 = vrot.slane %v1366, %v1395
    %v1397 = vlaneseq
    %v1398 = vshrl.u32 %v1397, 7
    %v1399 = vsub.s32 %v853, %v1398
    %v1400 = vrot.slane %v1369, %v1399
    %v1401 = vlaneseq
    %v1402 = vshrl.u32 %v1401, 7
    %v1403 = vsub.s32 %v853, %v1402
    %v1404 = vrot.slane %v1372, %v1403
    %v1405 = vsel %vm886, %v1376, %v1376
    %v1406 = vsel %vm888, %v1376, %v1405
    %v1407 = vsel %vm890, %v1376, %v1406
    %v1408 = vsel %vm892, %v1376, %v1407
    %v1409 = vsel %vm894, %v1376, %v1408
    %v1410 = vsel %vm896, %v1376, %v1409
    %v1411 = vsel %vm886, %v1380, %v1380
    %v1412 = vsel %vm888, %v1380, %v1411
    %v1413 = vsel %vm890, %v1380, %v1412
    %v1414 = vsel %vm892, %v1380, %v1413
    %v1415 = vsel %vm894, %v1380, %v1414
    %v1416 = vsel %vm896, %v1380, %v1415
    %v1417 = vsel %vm886, %v1384, %v1384
    %v1418 = vsel %vm888, %v1384, %v1417
    %v1419 = vsel %vm890, %v1384, %v1418
    %v1420 = vsel %vm892, %v1384, %v1419
    %v1421 = vsel %vm894, %v1384, %v1420
    %v1422 = vsel %vm896, %v1384, %v1421
    %v1423 = vsel %vm886, %v1388, %v1388
    %v1424 = vsel %vm888, %v1388, %v1423
    %v1425 = vsel %vm890, %v1388, %v1424
    %v1426 = vsel %vm892, %v1388, %v1425
    %v1427 = vsel %vm894, %v1388, %v1426
    %v1428 = vsel %vm896, %v1388, %v1427
    %v1429 = vsel %vm886, %v1392, %v1392
    %v1430 = vsel %vm888, %v1392, %v1429
    %v1431 = vsel %vm890, %v1392, %v1430
    %v1432 = vsel %vm892, %v1392, %v1431
    %v1433 = vsel %vm894, %v1392, %v1432
    %v1434 = vsel %vm896, %v1392, %v1433
    %v1435 = vsel %vm886, %v1396, %v1396
    %v1436 = vsel %vm888, %v1396, %v1435
    %v1437 = vsel %vm890, %v1396, %v1436
    %v1438 = vsel %vm892, %v1396, %v1437
    %v1439 = vsel %vm894, %v1396, %v1438
    %v1440 = vsel %vm896, %v1396, %v1439
    %v1441 = vsel %vm886, %v1400, %v1400
    %v1442 = vsel %vm888, %v1400, %v1441
    %v1443 = vsel %vm890, %v1400, %v1442
    %v1444 = vsel %vm892, %v1400, %v1443
    %v1445 = vsel %vm894, %v1400, %v1444
    %v1446 = vsel %vm896, %v1400, %v1445
    %v1447 = vsel %vm886, %v1404, %v1404
    %v1448 = vsel %vm888, %v1404, %v1447
    %v1449 = vsel %vm890, %v1404, %v1448
    %v1450 = vsel %vm892, %v1404, %v1449
    %v1451 = vsel %vm894, %v1404, %v1450
    %v1452 = vsel %vm896, %v1404, %v1451
    %v1461 = vmul.f32 %v1319, %v1410
    %v1462 = vmul.f32 %v1323, %v1416
    %v1463 = vmul.f32 %v1327, %v1422
    %v1464 = vmul.f32 %v1331, %v1428
    %v1465 = vmul.f32 %v1335, %v1434
    %v1466 = vmul.f32 %v1339, %v1440
    %v1467 = vmul.f32 %v1343, %v1446
    %v1468 = vmul.f32 %v1347, %v1452
    %v1469 = vsel %vm956, %v1461, -inf
    %1470 = vmax.xlane.f32.xlu0 %v1469
    %v1471 = vpop.xlane.xlu0 %1470
    %v1472 = vsel %vm956, %v1462, -inf
    %1473 = vmax.xlane.f32.xlu0 %v1472
    %v1474 = vpop.xlane.xlu0 %1473
    %v1475 = vsel %vm956, %v1463, -inf
    %1476 = vmax.xlane.f32.xlu0 %v1475
    %v1477 = vpop.xlane.xlu0 %1476
    %v1478 = vsel %vm956, %v1464, -inf
    %1479 = vmax.xlane.f32.xlu0 %v1478
    %v1480 = vpop.xlane.xlu0 %1479
    %v1481 = vsel %vm956, %v1465, -inf
    %1482 = vmax.xlane.f32.xlu0 %v1481
    %v1483 = vpop.xlane.xlu0 %1482
    %v1484 = vsel %vm956, %v1466, -inf
    %1485 = vmax.xlane.f32.xlu0 %v1484
    %v1486 = vpop.xlane.xlu0 %1485
    %v1487 = vsel %vm956, %v1467, -inf
    %1488 = vmax.xlane.f32.xlu0 %v1487
    %v1489 = vpop.xlane.xlu0 %1488
    %v1490 = vsel %vm956, %v1468, -inf
    %1491 = vmax.xlane.f32.xlu0 %v1490
    %v1492 = vpop.xlane.xlu0 %1491
    %v1493 = vsub.f32 %v1461, %v1471
    %v1494 = vsub.f32 %v1462, %v1474
    %v1495 = vsub.f32 %v1463, %v1477
    %v1496 = vsub.f32 %v1464, %v1480
    %v1497 = vsub.f32 %v1465, %v1483
    %v1498 = vsub.f32 %v1466, %v1486
    %v1499 = vsub.f32 %v1467, %v1489
    %v1500 = vsub.f32 %v1468, %v1492
    %v1501 = vmul.f32 %v1493, 1.442695
    %v1502 = vpow.pop %v1501
    %v1503 = vmul.f32 %v1494, 1.442695
    %v1504 = vpow.pop %v1503
    %v1505 = vmul.f32 %v1495, 1.442695
    %v1506 = vpow.pop %v1505
    %v1507 = vmul.f32 %v1496, 1.442695
    %v1508 = vpow.pop %v1507
    %v1509 = vmul.f32 %v1497, 1.442695
    %v1510 = vpow.pop %v1509
    %v1511 = vmul.f32 %v1498, 1.442695
    %v1512 = vpow.pop %v1511
    %v1513 = vmul.f32 %v1499, 1.442695
    %v1514 = vpow.pop %v1513
    %v1515 = vmul.f32 %v1500, 1.442695
    %v1516 = vpow.pop %v1515
    %v1517 = vsel %vm956, %v1502, 0.0
    %1518 = vadd.xlane.f32.xlu0 %v1517
    %v1519 = vpop.xlane.xlu0 %1518
    %v1520 = vsel %vm956, %v1504, 0.0
    %1521 = vadd.xlane.f32.xlu0 %v1520
    %v1522 = vpop.xlane.xlu0 %1521
    %v1523 = vsel %vm956, %v1506, 0.0
    %1524 = vadd.xlane.f32.xlu0 %v1523
    %v1525 = vpop.xlane.xlu0 %1524
    %v1526 = vsel %vm956, %v1508, 0.0
    %1527 = vadd.xlane.f32.xlu0 %v1526
    %v1528 = vpop.xlane.xlu0 %1527
    %v1529 = vsel %vm956, %v1510, 0.0
    %1530 = vadd.xlane.f32.xlu0 %v1529
    %v1531 = vpop.xlane.xlu0 %1530
    %v1532 = vsel %vm956, %v1512, 0.0
    %1533 = vadd.xlane.f32.xlu0 %v1532
    %v1534 = vpop.xlane.xlu0 %1533
    %v1535 = vsel %vm956, %v1514, 0.0
    %1536 = vadd.xlane.f32.xlu0 %v1535
    %v1537 = vpop.xlane.xlu0 %1536
    %v1538 = vsel %vm956, %v1516, 0.0
    %1539 = vadd.xlane.f32.xlu0 %v1538
    %v1540 = vpop.xlane.xlu0 %1539
    %v1541 = vrcp.pop %v1519
    %v1542 = vmul.f32 0.25, %v1541
    %v1543 = vrcp.pop %v1522
    %v1544 = vmul.f32 0.25, %v1543
    %v1545 = vrcp.pop %v1525
    %v1546 = vmul.f32 0.25, %v1545
    %v1547 = vrcp.pop %v1528
    %v1548 = vmul.f32 0.25, %v1547
    %v1549 = vrcp.pop %v1531
    %v1550 = vmul.f32 0.25, %v1549
    %v1551 = vrcp.pop %v1534
    %v1552 = vmul.f32 0.25, %v1551
    %v1553 = vrcp.pop %v1537
    %v1554 = vmul.f32 0.25, %v1553
    %v1555 = vrcp.pop %v1540
    %v1556 = vmul.f32 0.25, %v1555
    %v1557 = vmul.f32 %v1502, %v1542
    %v1558 = vmul.f32 %v1504, %v1544
    %v1559 = vmul.f32 %v1506, %v1546
    %v1560 = vmul.f32 %v1508, %v1548
    %v1561 = vmul.f32 %v1510, %v1550
    %v1562 = vmul.f32 %v1512, %v1552
    %v1563 = vmul.f32 %v1514, %v1554
    %v1564 = vmul.f32 %v1516, %v1556
    %v1565 = vadd.f32 %v1309, %v1557
    %v1566 = vadd.f32 %v1310, %v1558
    %v1567 = vadd.f32 %v1311, %v1559
    %v1568 = vadd.f32 %v1312, %v1560
    %v1569 = vadd.f32 %v1313, %v1561
    %v1570 = vadd.f32 %v1314, %v1562
    %v1571 = vadd.f32 %v1315, %v1563
    %v1572 = vadd.f32 %v1316, %v1564
    %1573 = vset.pattern.permute.xlu0 3
    %1574 = vperm.xlu0 %1573, %v772
    %v1575 = vpop.permute.xlu0 %1574
    %1577 = vset.pattern.permute.xlu0 3
    %1578 = vperm.xlu0 %1577, %v773
    %v1579 = vpop.permute.xlu0 %1578
    %1581 = vset.pattern.permute.xlu0 3
    %1582 = vperm.xlu0 %1581, %v774
    %v1583 = vpop.permute.xlu0 %1582
    %1585 = vset.pattern.permute.xlu0 3
    %1586 = vperm.xlu0 %1585, %v775
    %v1587 = vpop.permute.xlu0 %1586
    %1589 = vset.pattern.permute.xlu0 3
    %1590 = vperm.xlu0 %1589, %v776
    %v1591 = vpop.permute.xlu0 %1590
    %1593 = vset.pattern.permute.xlu0 3
    %1594 = vperm.xlu0 %1593, %v777
    %v1595 = vpop.permute.xlu0 %1594
    %1597 = vset.pattern.permute.xlu0 3
    %1598 = vperm.xlu0 %1597, %v778
    %v1599 = vpop.permute.xlu0 %1598
    %1601 = vset.pattern.permute.xlu0 3
    %1602 = vperm.xlu0 %1601, %v779
    %v1603 = vpop.permute.xlu0 %1602
    %1605 = vset.pattern.permute.xlu0 7
    %1606 = vperm.xlu0 %1605, %v694
    %v1607 = vpop.permute.xlu0 %1606
    %1608 = vset.pattern.permute.xlu0 7
    %1609 = vperm.xlu0 %1608, %v699
    %v1610 = vpop.permute.xlu0 %1609
    %1611 = vset.pattern.permute.xlu0 7
    %1612 = vperm.xlu0 %1611, %v704
    %v1613 = vpop.permute.xlu0 %1612
    %1614 = vset.pattern.permute.xlu0 7
    %1615 = vperm.xlu0 %1614, %v709
    %v1616 = vpop.permute.xlu0 %1615
    %1617 = vset.pattern.permute.xlu0 7
    %1618 = vperm.xlu0 %1617, %v714
    %v1619 = vpop.permute.xlu0 %1618
    %1620 = vset.pattern.permute.xlu0 7
    %1621 = vperm.xlu0 %1620, %v719
    %v1622 = vpop.permute.xlu0 %1621
    %1623 = vset.pattern.permute.xlu0 7
    %1624 = vperm.xlu0 %1623, %v724
    %v1625 = vpop.permute.xlu0 %1624
    %1626 = vset.pattern.permute.xlu0 7
    %1627 = vperm.xlu0 %1626, %v729
    %v1628 = vpop.permute.xlu0 %1627
    %v1629 = vlaneseq
    %v1630 = vshrl.u32 %v1629, 7
    %v1631 = vsub.s32 %v853, %v1630
    %v1632 = vrot.slane %v1607, %v1631
    %v1633 = vlaneseq
    %v1634 = vshrl.u32 %v1633, 7
    %v1635 = vsub.s32 %v853, %v1634
    %v1636 = vrot.slane %v1610, %v1635
    %v1637 = vlaneseq
    %v1638 = vshrl.u32 %v1637, 7
    %v1639 = vsub.s32 %v853, %v1638
    %v1640 = vrot.slane %v1613, %v1639
    %v1641 = vlaneseq
    %v1642 = vshrl.u32 %v1641, 7
    %v1643 = vsub.s32 %v853, %v1642
    %v1644 = vrot.slane %v1616, %v1643
    %v1645 = vlaneseq
    %v1646 = vshrl.u32 %v1645, 7
    %v1647 = vsub.s32 %v853, %v1646
    %v1648 = vrot.slane %v1619, %v1647
    %v1649 = vlaneseq
    %v1650 = vshrl.u32 %v1649, 7
    %v1651 = vsub.s32 %v853, %v1650
    %v1652 = vrot.slane %v1622, %v1651
    %v1653 = vlaneseq
    %v1654 = vshrl.u32 %v1653, 7
    %v1655 = vsub.s32 %v853, %v1654
    %v1656 = vrot.slane %v1625, %v1655
    %v1657 = vlaneseq
    %v1658 = vshrl.u32 %v1657, 7
    %v1659 = vsub.s32 %v853, %v1658
    %v1660 = vrot.slane %v1628, %v1659
    %v1661 = vsel %vm886, %v1632, %v1632
    %v1662 = vsel %vm888, %v1632, %v1661
    %v1663 = vsel %vm890, %v1632, %v1662
    %v1664 = vsel %vm892, %v1632, %v1663
    %v1665 = vsel %vm894, %v1632, %v1664
    %v1666 = vsel %vm896, %v1632, %v1665
    %v1667 = vsel %vm886, %v1636, %v1636
    %v1668 = vsel %vm888, %v1636, %v1667
    %v1669 = vsel %vm890, %v1636, %v1668
    %v1670 = vsel %vm892, %v1636, %v1669
    %v1671 = vsel %vm894, %v1636, %v1670
    %v1672 = vsel %vm896, %v1636, %v1671
    %v1673 = vsel %vm886, %v1640, %v1640
    %v1674 = vsel %vm888, %v1640, %v1673
    %v1675 = vsel %vm890, %v1640, %v1674
    %v1676 = vsel %vm892, %v1640, %v1675
    %v1677 = vsel %vm894, %v1640, %v1676
    %v1678 = vsel %vm896, %v1640, %v1677
    %v1679 = vsel %vm886, %v1644, %v1644
    %v1680 = vsel %vm888, %v1644, %v1679
    %v1681 = vsel %vm890, %v1644, %v1680
    %v1682 = vsel %vm892, %v1644, %v1681
    %v1683 = vsel %vm894, %v1644, %v1682
    %v1684 = vsel %vm896, %v1644, %v1683
    %v1685 = vsel %vm886, %v1648, %v1648
    %v1686 = vsel %vm888, %v1648, %v1685
    %v1687 = vsel %vm890, %v1648, %v1686
    %v1688 = vsel %vm892, %v1648, %v1687
    %v1689 = vsel %vm894, %v1648, %v1688
    %v1690 = vsel %vm896, %v1648, %v1689
    %v1691 = vsel %vm886, %v1652, %v1652
    %v1692 = vsel %vm888, %v1652, %v1691
    %v1693 = vsel %vm890, %v1652, %v1692
    %v1694 = vsel %vm892, %v1652, %v1693
    %v1695 = vsel %vm894, %v1652, %v1694
    %v1696 = vsel %vm896, %v1652, %v1695
    %v1697 = vsel %vm886, %v1656, %v1656
    %v1698 = vsel %vm888, %v1656, %v1697
    %v1699 = vsel %vm890, %v1656, %v1698
    %v1700 = vsel %vm892, %v1656, %v1699
    %v1701 = vsel %vm894, %v1656, %v1700
    %v1702 = vsel %vm896, %v1656, %v1701
    %v1703 = vsel %vm886, %v1660, %v1660
    %v1704 = vsel %vm888, %v1660, %v1703
    %v1705 = vsel %vm890, %v1660, %v1704
    %v1706 = vsel %vm892, %v1660, %v1705
    %v1707 = vsel %vm894, %v1660, %v1706
    %v1708 = vsel %vm896, %v1660, %v1707
    %v1717 = vmul.f32 %v1575, %v1666
    %v1718 = vmul.f32 %v1579, %v1672
    %v1719 = vmul.f32 %v1583, %v1678
    %v1720 = vmul.f32 %v1587, %v1684
    %v1721 = vmul.f32 %v1591, %v1690
    %v1722 = vmul.f32 %v1595, %v1696
    %v1723 = vmul.f32 %v1599, %v1702
    %v1724 = vmul.f32 %v1603, %v1708
    %v1725 = vsel %vm956, %v1717, -inf
    %1726 = vmax.xlane.f32.xlu0 %v1725
    %v1727 = vpop.xlane.xlu0 %1726
    %v1728 = vsel %vm956, %v1718, -inf
    %1729 = vmax.xlane.f32.xlu0 %v1728
    %v1730 = vpop.xlane.xlu0 %1729
    %v1731 = vsel %vm956, %v1719, -inf
    %1732 = vmax.xlane.f32.xlu0 %v1731
    %v1733 = vpop.xlane.xlu0 %1732
    %v1734 = vsel %vm956, %v1720, -inf
    %1735 = vmax.xlane.f32.xlu0 %v1734
    %v1736 = vpop.xlane.xlu0 %1735
    %v1737 = vsel %vm956, %v1721, -inf
    %1738 = vmax.xlane.f32.xlu0 %v1737
    %v1739 = vpop.xlane.xlu0 %1738
    %v1740 = vsel %vm956, %v1722, -inf
    %1741 = vmax.xlane.f32.xlu0 %v1740
    %v1742 = vpop.xlane.xlu0 %1741
    %v1743 = vsel %vm956, %v1723, -inf
    %1744 = vmax.xlane.f32.xlu0 %v1743
    %v1745 = vpop.xlane.xlu0 %1744
    %v1746 = vsel %vm956, %v1724, -inf
    %1747 = vmax.xlane.f32.xlu0 %v1746
    %v1748 = vpop.xlane.xlu0 %1747
    %v1749 = vsub.f32 %v1717, %v1727
    %v1750 = vsub.f32 %v1718, %v1730
    %v1751 = vsub.f32 %v1719, %v1733
    %v1752 = vsub.f32 %v1720, %v1736
    %v1753 = vsub.f32 %v1721, %v1739
    %v1754 = vsub.f32 %v1722, %v1742
    %v1755 = vsub.f32 %v1723, %v1745
    %v1756 = vsub.f32 %v1724, %v1748
    %v1757 = vmul.f32 %v1749, 1.442695
    %v1758 = vpow.pop %v1757
    %v1759 = vmul.f32 %v1750, 1.442695
    %v1760 = vpow.pop %v1759
    %v1761 = vmul.f32 %v1751, 1.442695
    %v1762 = vpow.pop %v1761
    %v1763 = vmul.f32 %v1752, 1.442695
    %v1764 = vpow.pop %v1763
    %v1765 = vmul.f32 %v1753, 1.442695
    %v1766 = vpow.pop %v1765
    %v1767 = vmul.f32 %v1754, 1.442695
    %v1768 = vpow.pop %v1767
    %v1769 = vmul.f32 %v1755, 1.442695
    %v1770 = vpow.pop %v1769
    %v1771 = vmul.f32 %v1756, 1.442695
    %v1772 = vpow.pop %v1771
    %v1773 = vsel %vm956, %v1758, 0.0
    %1774 = vadd.xlane.f32.xlu0 %v1773
    %v1775 = vpop.xlane.xlu0 %1774
    %v1776 = vsel %vm956, %v1760, 0.0
    %1777 = vadd.xlane.f32.xlu0 %v1776
    %v1778 = vpop.xlane.xlu0 %1777
    %v1779 = vsel %vm956, %v1762, 0.0
    %1780 = vadd.xlane.f32.xlu0 %v1779
    %v1781 = vpop.xlane.xlu0 %1780
    %v1782 = vsel %vm956, %v1764, 0.0
    %1783 = vadd.xlane.f32.xlu0 %v1782
    %v1784 = vpop.xlane.xlu0 %1783
    %v1785 = vsel %vm956, %v1766, 0.0
    %1786 = vadd.xlane.f32.xlu0 %v1785
    %v1787 = vpop.xlane.xlu0 %1786
    %v1788 = vsel %vm956, %v1768, 0.0
    %1789 = vadd.xlane.f32.xlu0 %v1788
    %v1790 = vpop.xlane.xlu0 %1789
    %v1791 = vsel %vm956, %v1770, 0.0
    %1792 = vadd.xlane.f32.xlu0 %v1791
    %v1793 = vpop.xlane.xlu0 %1792
    %v1794 = vsel %vm956, %v1772, 0.0
    %1795 = vadd.xlane.f32.xlu0 %v1794
    %v1796 = vpop.xlane.xlu0 %1795
    %v1797 = vrcp.pop %v1775
    %v1798 = vmul.f32 0.25, %v1797
    %v1799 = vrcp.pop %v1778
    %v1800 = vmul.f32 0.25, %v1799
    %v1801 = vrcp.pop %v1781
    %v1802 = vmul.f32 0.25, %v1801
    %v1803 = vrcp.pop %v1784
    %v1804 = vmul.f32 0.25, %v1803
    %v1805 = vrcp.pop %v1787
    %v1806 = vmul.f32 0.25, %v1805
    %v1807 = vrcp.pop %v1790
    %v1808 = vmul.f32 0.25, %v1807
    %v1809 = vrcp.pop %v1793
    %v1810 = vmul.f32 0.25, %v1809
    %v1811 = vrcp.pop %v1796
    %v1812 = vmul.f32 0.25, %v1811
    %v1813 = vmul.f32 %v1758, %v1798
    %v1814 = vmul.f32 %v1760, %v1800
    %v1815 = vmul.f32 %v1762, %v1802
    %v1816 = vmul.f32 %v1764, %v1804
    %v1817 = vmul.f32 %v1766, %v1806
    %v1818 = vmul.f32 %v1768, %v1808
    %v1819 = vmul.f32 %v1770, %v1810
    %v1820 = vmul.f32 %v1772, %v1812
    %v1821 = vadd.f32 %v1565, %v1813
    %v1822 = vadd.f32 %v1566, %v1814
    %v1823 = vadd.f32 %v1567, %v1815
    %v1824 = vadd.f32 %v1568, %v1816
    %v1825 = vadd.f32 %v1569, %v1817
    %v1826 = vadd.f32 %v1570, %v1818
    %v1827 = vadd.f32 %v1571, %v1819
    %v1828 = vadd.f32 %v1572, %v1820
    %1830 = vset.pattern.permute.xlu0 0
    %1831 = vperm.xlu0 %1830, %v1821
    %v1832 = vpop.permute.xlu0 %1831
    %1835 = vset.pattern.permute.xlu0 0
    %1836 = vperm.xlu0 %1835, %v1822
    %v1837 = vpop.permute.xlu0 %1836
    %1840 = vset.pattern.permute.xlu0 0
    %1841 = vperm.xlu0 %1840, %v1823
    %v1842 = vpop.permute.xlu0 %1841
    %1845 = vset.pattern.permute.xlu0 0
    %1846 = vperm.xlu0 %1845, %v1824
    %v1847 = vpop.permute.xlu0 %1846
    %1850 = vset.pattern.permute.xlu0 0
    %1851 = vperm.xlu0 %1850, %v1825
    %v1852 = vpop.permute.xlu0 %1851
    %1855 = vset.pattern.permute.xlu0 0
    %1856 = vperm.xlu0 %1855, %v1826
    %v1857 = vpop.permute.xlu0 %1856
    %1860 = vset.pattern.permute.xlu0 0
    %1861 = vperm.xlu0 %1860, %v1827
    %v1862 = vpop.permute.xlu0 %1861
    %1865 = vset.pattern.permute.xlu0 0
    %1866 = vperm.xlu0 %1865, %v1828
    %v1867 = vpop.permute.xlu0 %1866
    %v1869 = vlaneseq
    %v1870 = vshrl.u32 %v1869, 7
    %v1871 = vsub.s32 0, %v1870
    %v1872 = vrot.slane %v734, %v1871
    %v1873 = vlaneseq
    %v1874 = vshrl.u32 %v1873, 7
    %v1875 = vsub.s32 0, %v1874
    %v1876 = vrot.slane %v739, %v1875
    %v1877 = vlaneseq
    %v1878 = vshrl.u32 %v1877, 7
    %v1879 = vsub.s32 0, %v1878
    %v1880 = vrot.slane %v744, %v1879
    %v1881 = vlaneseq
    %v1882 = vshrl.u32 %v1881, 7
    %v1883 = vsub.s32 0, %v1882
    %v1884 = vrot.slane %v749, %v1883
    %v1885 = vlaneseq
    %v1886 = vshrl.u32 %v1885, 7
    %v1887 = vsub.s32 0, %v1886
    %v1888 = vrot.slane %v754, %v1887
    %v1889 = vlaneseq
    %v1890 = vshrl.u32 %v1889, 7
    %v1891 = vsub.s32 0, %v1890
    %v1892 = vrot.slane %v759, %v1891
    %v1893 = vlaneseq
    %v1894 = vshrl.u32 %v1893, 7
    %v1895 = vsub.s32 0, %v1894
    %v1896 = vrot.slane %v764, %v1895
    %v1897 = vlaneseq
    %v1898 = vshrl.u32 %v1897, 7
    %v1899 = vsub.s32 0, %v1898
    %v1900 = vrot.slane %v769, %v1899
    %v1901 = vmul.f32 %v1832, %v1872
    %v1902 = vmul.f32 %v1837, %v1876
    %v1903 = vmul.f32 %v1842, %v1880
    %v1904 = vmul.f32 %v1847, %v1884
    %v1905 = vmul.f32 %v1852, %v1888
    %v1906 = vmul.f32 %v1857, %v1892
    %v1907 = vmul.f32 %v1862, %v1896
    %v1908 = vmul.f32 %v1867, %v1900
    %1909 = vset.pattern.permute.xlu0 1
    %1910 = vperm.xlu0 %1909, %v1821
    %v1911 = vpop.permute.xlu0 %1910
    %1913 = vset.pattern.permute.xlu0 1
    %1914 = vperm.xlu0 %1913, %v1822
    %v1915 = vpop.permute.xlu0 %1914
    %1917 = vset.pattern.permute.xlu0 1
    %1918 = vperm.xlu0 %1917, %v1823
    %v1919 = vpop.permute.xlu0 %1918
    %1921 = vset.pattern.permute.xlu0 1
    %1922 = vperm.xlu0 %1921, %v1824
    %v1923 = vpop.permute.xlu0 %1922
    %1925 = vset.pattern.permute.xlu0 1
    %1926 = vperm.xlu0 %1925, %v1825
    %v1927 = vpop.permute.xlu0 %1926
    %1929 = vset.pattern.permute.xlu0 1
    %1930 = vperm.xlu0 %1929, %v1826
    %v1931 = vpop.permute.xlu0 %1930
    %1933 = vset.pattern.permute.xlu0 1
    %1934 = vperm.xlu0 %1933, %v1827
    %v1935 = vpop.permute.xlu0 %1934
    %1937 = vset.pattern.permute.xlu0 1
    %1938 = vperm.xlu0 %1937, %v1828
    %v1939 = vpop.permute.xlu0 %1938
    %v1941 = vlaneseq
    %v1942 = vshrl.u32 %v1941, 7
    %v1943 = vsub.s32 1, %v1942
    %v1944 = vrot.slane %v734, %v1943
    %v1945 = vlaneseq
    %v1946 = vshrl.u32 %v1945, 7
    %v1947 = vsub.s32 1, %v1946
    %v1948 = vrot.slane %v739, %v1947
    %v1949 = vlaneseq
    %v1950 = vshrl.u32 %v1949, 7
    %v1951 = vsub.s32 1, %v1950
    %v1952 = vrot.slane %v744, %v1951
    %v1953 = vlaneseq
    %v1954 = vshrl.u32 %v1953, 7
    %v1955 = vsub.s32 1, %v1954
    %v1956 = vrot.slane %v749, %v1955
    %v1957 = vlaneseq
    %v1958 = vshrl.u32 %v1957, 7
    %v1959 = vsub.s32 1, %v1958
    %v1960 = vrot.slane %v754, %v1959
    %v1961 = vlaneseq
    %v1962 = vshrl.u32 %v1961, 7
    %v1963 = vsub.s32 1, %v1962
    %v1964 = vrot.slane %v759, %v1963
    %v1965 = vlaneseq
    %v1966 = vshrl.u32 %v1965, 7
    %v1967 = vsub.s32 1, %v1966
    %v1968 = vrot.slane %v764, %v1967
    %v1969 = vlaneseq
    %v1970 = vshrl.u32 %v1969, 7
    %v1971 = vsub.s32 1, %v1970
    %v1972 = vrot.slane %v769, %v1971
    %v1973 = vmul.f32 %v1911, %v1944
    %v1974 = vmul.f32 %v1915, %v1948
    %v1975 = vmul.f32 %v1919, %v1952
    %v1976 = vmul.f32 %v1923, %v1956
    %v1977 = vmul.f32 %v1927, %v1960
    %v1978 = vmul.f32 %v1931, %v1964
    %v1979 = vmul.f32 %v1935, %v1968
    %v1980 = vmul.f32 %v1939, %v1972
    %v1981 = vadd.f32 %v1901, %v1973
    %v1982 = vadd.f32 %v1902, %v1974
    %v1983 = vadd.f32 %v1903, %v1975
    %v1984 = vadd.f32 %v1904, %v1976
    %v1985 = vadd.f32 %v1905, %v1977
    %v1986 = vadd.f32 %v1906, %v1978
    %v1987 = vadd.f32 %v1907, %v1979
    %v1988 = vadd.f32 %v1908, %v1980
    %1989 = vset.pattern.permute.xlu0 2
    %1990 = vperm.xlu0 %1989, %v1821
    %v1991 = vpop.permute.xlu0 %1990
    %1993 = vset.pattern.permute.xlu0 2
    %1994 = vperm.xlu0 %1993, %v1822
    %v1995 = vpop.permute.xlu0 %1994
    %1997 = vset.pattern.permute.xlu0 2
    %1998 = vperm.xlu0 %1997, %v1823
    %v1999 = vpop.permute.xlu0 %1998
    %2001 = vset.pattern.permute.xlu0 2
    %2002 = vperm.xlu0 %2001, %v1824
    %v2003 = vpop.permute.xlu0 %2002
    %2005 = vset.pattern.permute.xlu0 2
    %2006 = vperm.xlu0 %2005, %v1825
    %v2007 = vpop.permute.xlu0 %2006
    %2009 = vset.pattern.permute.xlu0 2
    %2010 = vperm.xlu0 %2009, %v1826
    %v2011 = vpop.permute.xlu0 %2010
    %2013 = vset.pattern.permute.xlu0 2
    %2014 = vperm.xlu0 %2013, %v1827
    %v2015 = vpop.permute.xlu0 %2014
    %2017 = vset.pattern.permute.xlu0 2
    %2018 = vperm.xlu0 %2017, %v1828
    %v2019 = vpop.permute.xlu0 %2018
    %v2021 = vlaneseq
    %v2022 = vshrl.u32 %v2021, 7
    %v2023 = vsub.s32 2, %v2022
    %v2024 = vrot.slane %v734, %v2023
    %v2025 = vlaneseq
    %v2026 = vshrl.u32 %v2025, 7
    %v2027 = vsub.s32 2, %v2026
    %v2028 = vrot.slane %v739, %v2027
    %v2029 = vlaneseq
    %v2030 = vshrl.u32 %v2029, 7
    %v2031 = vsub.s32 2, %v2030
    %v2032 = vrot.slane %v744, %v2031
    %v2033 = vlaneseq
    %v2034 = vshrl.u32 %v2033, 7
    %v2035 = vsub.s32 2, %v2034
    %v2036 = vrot.slane %v749, %v2035
    %v2037 = vlaneseq
    %v2038 = vshrl.u32 %v2037, 7
    %v2039 = vsub.s32 2, %v2038
    %v2040 = vrot.slane %v754, %v2039
    %v2041 = vlaneseq
    %v2042 = vshrl.u32 %v2041, 7
    %v2043 = vsub.s32 2, %v2042
    %v2044 = vrot.slane %v759, %v2043
    %v2045 = vlaneseq
    %v2046 = vshrl.u32 %v2045, 7
    %v2047 = vsub.s32 2, %v2046
    %v2048 = vrot.slane %v764, %v2047
    %v2049 = vlaneseq
    %v2050 = vshrl.u32 %v2049, 7
    %v2051 = vsub.s32 2, %v2050
    %v2052 = vrot.slane %v769, %v2051
    %v2053 = vmul.f32 %v1991, %v2024
    %v2054 = vmul.f32 %v1995, %v2028
    %v2055 = vmul.f32 %v1999, %v2032
    %v2056 = vmul.f32 %v2003, %v2036
    %v2057 = vmul.f32 %v2007, %v2040
    %v2058 = vmul.f32 %v2011, %v2044
    %v2059 = vmul.f32 %v2015, %v2048
    %v2060 = vmul.f32 %v2019, %v2052
    %v2061 = vadd.f32 %v1981, %v2053
    %v2062 = vadd.f32 %v1982, %v2054
    %v2063 = vadd.f32 %v1983, %v2055
    %v2064 = vadd.f32 %v1984, %v2056
    %v2065 = vadd.f32 %v1985, %v2057
    %v2066 = vadd.f32 %v1986, %v2058
    %v2067 = vadd.f32 %v1987, %v2059
    %v2068 = vadd.f32 %v1988, %v2060
    %2069 = vset.pattern.permute.xlu0 3
    %2070 = vperm.xlu0 %2069, %v1821
    %v2071 = vpop.permute.xlu0 %2070
    %2073 = vset.pattern.permute.xlu0 3
    %2074 = vperm.xlu0 %2073, %v1822
    %v2075 = vpop.permute.xlu0 %2074
    %2077 = vset.pattern.permute.xlu0 3
    %2078 = vperm.xlu0 %2077, %v1823
    %v2079 = vpop.permute.xlu0 %2078
    %2081 = vset.pattern.permute.xlu0 3
    %2082 = vperm.xlu0 %2081, %v1824
    %v2083 = vpop.permute.xlu0 %2082
    %2085 = vset.pattern.permute.xlu0 3
    %2086 = vperm.xlu0 %2085, %v1825
    %v2087 = vpop.permute.xlu0 %2086
    %2089 = vset.pattern.permute.xlu0 3
    %2090 = vperm.xlu0 %2089, %v1826
    %v2091 = vpop.permute.xlu0 %2090
    %2093 = vset.pattern.permute.xlu0 3
    %2094 = vperm.xlu0 %2093, %v1827
    %v2095 = vpop.permute.xlu0 %2094
    %2097 = vset.pattern.permute.xlu0 3
    %2098 = vperm.xlu0 %2097, %v1828
    %v2099 = vpop.permute.xlu0 %2098
    %v2101 = vlaneseq
    %v2102 = vshrl.u32 %v2101, 7
    %v2103 = vsub.s32 3, %v2102
    %v2104 = vrot.slane %v734, %v2103
    %v2105 = vlaneseq
    %v2106 = vshrl.u32 %v2105, 7
    %v2107 = vsub.s32 3, %v2106
    %v2108 = vrot.slane %v739, %v2107
    %v2109 = vlaneseq
    %v2110 = vshrl.u32 %v2109, 7
    %v2111 = vsub.s32 3, %v2110
    %v2112 = vrot.slane %v744, %v2111
    %v2113 = vlaneseq
    %v2114 = vshrl.u32 %v2113, 7
    %v2115 = vsub.s32 3, %v2114
    %v2116 = vrot.slane %v749, %v2115
    %v2117 = vlaneseq
    %v2118 = vshrl.u32 %v2117, 7
    %v2119 = vsub.s32 3, %v2118
    %v2120 = vrot.slane %v754, %v2119
    %v2121 = vlaneseq
    %v2122 = vshrl.u32 %v2121, 7
    %v2123 = vsub.s32 3, %v2122
    %v2124 = vrot.slane %v759, %v2123
    %v2125 = vlaneseq
    %v2126 = vshrl.u32 %v2125, 7
    %v2127 = vsub.s32 3, %v2126
    %v2128 = vrot.slane %v764, %v2127
    %v2129 = vlaneseq
    %v2130 = vshrl.u32 %v2129, 7
    %v2131 = vsub.s32 3, %v2130
    %v2132 = vrot.slane %v769, %v2131
    %v2133 = vmul.f32 %v2071, %v2104
    %v2134 = vmul.f32 %v2075, %v2108
    %v2135 = vmul.f32 %v2079, %v2112
    %v2136 = vmul.f32 %v2083, %v2116
    %v2137 = vmul.f32 %v2087, %v2120
    %v2138 = vmul.f32 %v2091, %v2124
    %v2139 = vmul.f32 %v2095, %v2128
    %v2140 = vmul.f32 %v2099, %v2132
    %v2141 = vadd.f32 %v2061, %v2133
    %v2142 = vadd.f32 %v2062, %v2134
    %v2143 = vadd.f32 %v2063, %v2135
    %v2144 = vadd.f32 %v2064, %v2136
    %v2145 = vadd.f32 %v2065, %v2137
    %v2146 = vadd.f32 %v2066, %v2138
    %v2147 = vadd.f32 %v2067, %v2139
    %v2148 = vadd.f32 %v2068, %v2140
    %2149 = vset.pattern.permute.xlu0 4
    %2150 = vperm.xlu0 %2149, %v1821
    %v2151 = vpop.permute.xlu0 %2150
    %2153 = vset.pattern.permute.xlu0 4
    %2154 = vperm.xlu0 %2153, %v1822
    %v2155 = vpop.permute.xlu0 %2154
    %2157 = vset.pattern.permute.xlu0 4
    %2158 = vperm.xlu0 %2157, %v1823
    %v2159 = vpop.permute.xlu0 %2158
    %2161 = vset.pattern.permute.xlu0 4
    %2162 = vperm.xlu0 %2161, %v1824
    %v2163 = vpop.permute.xlu0 %2162
    %2165 = vset.pattern.permute.xlu0 4
    %2166 = vperm.xlu0 %2165, %v1825
    %v2167 = vpop.permute.xlu0 %2166
    %2169 = vset.pattern.permute.xlu0 4
    %2170 = vperm.xlu0 %2169, %v1826
    %v2171 = vpop.permute.xlu0 %2170
    %2173 = vset.pattern.permute.xlu0 4
    %2174 = vperm.xlu0 %2173, %v1827
    %v2175 = vpop.permute.xlu0 %2174
    %2177 = vset.pattern.permute.xlu0 4
    %2178 = vperm.xlu0 %2177, %v1828
    %v2179 = vpop.permute.xlu0 %2178
    %v2181 = vlaneseq
    %v2182 = vshrl.u32 %v2181, 7
    %v2183 = vsub.s32 4, %v2182
    %v2184 = vrot.slane %v734, %v2183
    %v2185 = vlaneseq
    %v2186 = vshrl.u32 %v2185, 7
    %v2187 = vsub.s32 4, %v2186
    %v2188 = vrot.slane %v739, %v2187
    %v2189 = vlaneseq
    %v2190 = vshrl.u32 %v2189, 7
    %v2191 = vsub.s32 4, %v2190
    %v2192 = vrot.slane %v744, %v2191
    %v2193 = vlaneseq
    %v2194 = vshrl.u32 %v2193, 7
    %v2195 = vsub.s32 4, %v2194
    %v2196 = vrot.slane %v749, %v2195
    %v2197 = vlaneseq
    %v2198 = vshrl.u32 %v2197, 7
    %v2199 = vsub.s32 4, %v2198
    %v2200 = vrot.slane %v754, %v2199
    %v2201 = vlaneseq
    %v2202 = vshrl.u32 %v2201, 7
    %v2203 = vsub.s32 4, %v2202
    %v2204 = vrot.slane %v759, %v2203
    %v2205 = vlaneseq
    %v2206 = vshrl.u32 %v2205, 7
    %v2207 = vsub.s32 4, %v2206
    %v2208 = vrot.slane %v764, %v2207
    %v2209 = vlaneseq
    %v2210 = vshrl.u32 %v2209, 7
    %v2211 = vsub.s32 4, %v2210
    %v2212 = vrot.slane %v769, %v2211
    %v2213 = vmul.f32 %v2151, %v2184
    %v2214 = vmul.f32 %v2155, %v2188
    %v2215 = vmul.f32 %v2159, %v2192
    %v2216 = vmul.f32 %v2163, %v2196
    %v2217 = vmul.f32 %v2167, %v2200
    %v2218 = vmul.f32 %v2171, %v2204
    %v2219 = vmul.f32 %v2175, %v2208
    %v2220 = vmul.f32 %v2179, %v2212
    %v2221 = vadd.f32 %v2141, %v2213
    %v2222 = vadd.f32 %v2142, %v2214
    %v2223 = vadd.f32 %v2143, %v2215
    %v2224 = vadd.f32 %v2144, %v2216
    %v2225 = vadd.f32 %v2145, %v2217
    %v2226 = vadd.f32 %v2146, %v2218
    %v2227 = vadd.f32 %v2147, %v2219
    %v2228 = vadd.f32 %v2148, %v2220
    %2229 = vset.pattern.permute.xlu0 5
    %2230 = vperm.xlu0 %2229, %v1821
    %v2231 = vpop.permute.xlu0 %2230
    %2233 = vset.pattern.permute.xlu0 5
    %2234 = vperm.xlu0 %2233, %v1822
    %v2235 = vpop.permute.xlu0 %2234
    %2237 = vset.pattern.permute.xlu0 5
    %2238 = vperm.xlu0 %2237, %v1823
    %v2239 = vpop.permute.xlu0 %2238
    %2241 = vset.pattern.permute.xlu0 5
    %2242 = vperm.xlu0 %2241, %v1824
    %v2243 = vpop.permute.xlu0 %2242
    %2245 = vset.pattern.permute.xlu0 5
    %2246 = vperm.xlu0 %2245, %v1825
    %v2247 = vpop.permute.xlu0 %2246
    %2249 = vset.pattern.permute.xlu0 5
    %2250 = vperm.xlu0 %2249, %v1826
    %v2251 = vpop.permute.xlu0 %2250
    %2253 = vset.pattern.permute.xlu0 5
    %2254 = vperm.xlu0 %2253, %v1827
    %v2255 = vpop.permute.xlu0 %2254
    %2257 = vset.pattern.permute.xlu0 5
    %2258 = vperm.xlu0 %2257, %v1828
    %v2259 = vpop.permute.xlu0 %2258
    %v2261 = vlaneseq
    %v2262 = vshrl.u32 %v2261, 7
    %v2263 = vsub.s32 5, %v2262
    %v2264 = vrot.slane %v734, %v2263
    %v2265 = vlaneseq
    %v2266 = vshrl.u32 %v2265, 7
    %v2267 = vsub.s32 5, %v2266
    %v2268 = vrot.slane %v739, %v2267
    %v2269 = vlaneseq
    %v2270 = vshrl.u32 %v2269, 7
    %v2271 = vsub.s32 5, %v2270
    %v2272 = vrot.slane %v744, %v2271
    %v2273 = vlaneseq
    %v2274 = vshrl.u32 %v2273, 7
    %v2275 = vsub.s32 5, %v2274
    %v2276 = vrot.slane %v749, %v2275
    %v2277 = vlaneseq
    %v2278 = vshrl.u32 %v2277, 7
    %v2279 = vsub.s32 5, %v2278
    %v2280 = vrot.slane %v754, %v2279
    %v2281 = vlaneseq
    %v2282 = vshrl.u32 %v2281, 7
    %v2283 = vsub.s32 5, %v2282
    %v2284 = vrot.slane %v759, %v2283
    %v2285 = vlaneseq
    %v2286 = vshrl.u32 %v2285, 7
    %v2287 = vsub.s32 5, %v2286
    %v2288 = vrot.slane %v764, %v2287
    %v2289 = vlaneseq
    %v2290 = vshrl.u32 %v2289, 7
    %v2291 = vsub.s32 5, %v2290
    %v2292 = vrot.slane %v769, %v2291
    %v2293 = vmul.f32 %v2231, %v2264
    %v2294 = vmul.f32 %v2235, %v2268
    %v2295 = vmul.f32 %v2239, %v2272
    %v2296 = vmul.f32 %v2243, %v2276
    %v2297 = vmul.f32 %v2247, %v2280
    %v2298 = vmul.f32 %v2251, %v2284
    %v2299 = vmul.f32 %v2255, %v2288
    %v2300 = vmul.f32 %v2259, %v2292
    %v2301 = vadd.f32 %v2221, %v2293
    %v2302 = vadd.f32 %v2222, %v2294
    %v2303 = vadd.f32 %v2223, %v2295
    %v2304 = vadd.f32 %v2224, %v2296
    %v2305 = vadd.f32 %v2225, %v2297
    %v2306 = vadd.f32 %v2226, %v2298
    %v2307 = vadd.f32 %v2227, %v2299
    %v2308 = vadd.f32 %v2228, %v2300
    %2309 = vset.pattern.permute.xlu0 6
    %2310 = vperm.xlu0 %2309, %v1821
    %v2311 = vpop.permute.xlu0 %2310
    %2313 = vset.pattern.permute.xlu0 6
    %2314 = vperm.xlu0 %2313, %v1822
    %v2315 = vpop.permute.xlu0 %2314
    %2317 = vset.pattern.permute.xlu0 6
    %2318 = vperm.xlu0 %2317, %v1823
    %v2319 = vpop.permute.xlu0 %2318
    %2321 = vset.pattern.permute.xlu0 6
    %2322 = vperm.xlu0 %2321, %v1824
    %v2323 = vpop.permute.xlu0 %2322
    %2325 = vset.pattern.permute.xlu0 6
    %2326 = vperm.xlu0 %2325, %v1825
    %v2327 = vpop.permute.xlu0 %2326
    %2329 = vset.pattern.permute.xlu0 6
    %2330 = vperm.xlu0 %2329, %v1826
    %v2331 = vpop.permute.xlu0 %2330
    %2333 = vset.pattern.permute.xlu0 6
    %2334 = vperm.xlu0 %2333, %v1827
    %v2335 = vpop.permute.xlu0 %2334
    %2337 = vset.pattern.permute.xlu0 6
    %2338 = vperm.xlu0 %2337, %v1828
    %v2339 = vpop.permute.xlu0 %2338
    %v2341 = vlaneseq
    %v2342 = vshrl.u32 %v2341, 7
    %v2343 = vsub.s32 6, %v2342
    %v2344 = vrot.slane %v734, %v2343
    %v2345 = vlaneseq
    %v2346 = vshrl.u32 %v2345, 7
    %v2347 = vsub.s32 6, %v2346
    %v2348 = vrot.slane %v739, %v2347
    %v2349 = vlaneseq
    %v2350 = vshrl.u32 %v2349, 7
    %v2351 = vsub.s32 6, %v2350
    %v2352 = vrot.slane %v744, %v2351
    %v2353 = vlaneseq
    %v2354 = vshrl.u32 %v2353, 7
    %v2355 = vsub.s32 6, %v2354
    %v2356 = vrot.slane %v749, %v2355
    %v2357 = vlaneseq
    %v2358 = vshrl.u32 %v2357, 7
    %v2359 = vsub.s32 6, %v2358
    %v2360 = vrot.slane %v754, %v2359
    %v2361 = vlaneseq
    %v2362 = vshrl.u32 %v2361, 7
    %v2363 = vsub.s32 6, %v2362
    %v2364 = vrot.slane %v759, %v2363
    %v2365 = vlaneseq
    %v2366 = vshrl.u32 %v2365, 7
    %v2367 = vsub.s32 6, %v2366
    %v2368 = vrot.slane %v764, %v2367
    %v2369 = vlaneseq
    %v2370 = vshrl.u32 %v2369, 7
    %v2371 = vsub.s32 6, %v2370
    %v2372 = vrot.slane %v769, %v2371
    %v2373 = vmul.f32 %v2311, %v2344
    %v2374 = vmul.f32 %v2315, %v2348
    %v2375 = vmul.f32 %v2319, %v2352
    %v2376 = vmul.f32 %v2323, %v2356
    %v2377 = vmul.f32 %v2327, %v2360
    %v2378 = vmul.f32 %v2331, %v2364
    %v2379 = vmul.f32 %v2335, %v2368
    %v2380 = vmul.f32 %v2339, %v2372
    %v2381 = vadd.f32 %v2301, %v2373
    %v2382 = vadd.f32 %v2302, %v2374
    %v2383 = vadd.f32 %v2303, %v2375
    %v2384 = vadd.f32 %v2304, %v2376
    %v2385 = vadd.f32 %v2305, %v2377
    %v2386 = vadd.f32 %v2306, %v2378
    %v2387 = vadd.f32 %v2307, %v2379
    %v2388 = vadd.f32 %v2308, %v2380
    %2389 = vset.pattern.permute.xlu0 7
    %2390 = vperm.xlu0 %2389, %v1821
    %v2391 = vpop.permute.xlu0 %2390
    %2393 = vset.pattern.permute.xlu0 7
    %2394 = vperm.xlu0 %2393, %v1822
    %v2395 = vpop.permute.xlu0 %2394
    %2397 = vset.pattern.permute.xlu0 7
    %2398 = vperm.xlu0 %2397, %v1823
    %v2399 = vpop.permute.xlu0 %2398
    %2401 = vset.pattern.permute.xlu0 7
    %2402 = vperm.xlu0 %2401, %v1824
    %v2403 = vpop.permute.xlu0 %2402
    %2405 = vset.pattern.permute.xlu0 7
    %2406 = vperm.xlu0 %2405, %v1825
    %v2407 = vpop.permute.xlu0 %2406
    %2409 = vset.pattern.permute.xlu0 7
    %2410 = vperm.xlu0 %2409, %v1826
    %v2411 = vpop.permute.xlu0 %2410
    %2413 = vset.pattern.permute.xlu0 7
    %2414 = vperm.xlu0 %2413, %v1827
    %v2415 = vpop.permute.xlu0 %2414
    %2417 = vset.pattern.permute.xlu0 7
    %2418 = vperm.xlu0 %2417, %v1828
    %v2419 = vpop.permute.xlu0 %2418
    %v2421 = vlaneseq
    %v2422 = vshrl.u32 %v2421, 7
    %v2423 = vsub.s32 7, %v2422
    %v2424 = vrot.slane %v734, %v2423
    %v2425 = vlaneseq
    %v2426 = vshrl.u32 %v2425, 7
    %v2427 = vsub.s32 7, %v2426
    %v2428 = vrot.slane %v739, %v2427
    %v2429 = vlaneseq
    %v2430 = vshrl.u32 %v2429, 7
    %v2431 = vsub.s32 7, %v2430
    %v2432 = vrot.slane %v744, %v2431
    %v2433 = vlaneseq
    %v2434 = vshrl.u32 %v2433, 7
    %v2435 = vsub.s32 7, %v2434
    %v2436 = vrot.slane %v749, %v2435
    %v2437 = vlaneseq
    %v2438 = vshrl.u32 %v2437, 7
    %v2439 = vsub.s32 7, %v2438
    %v2440 = vrot.slane %v754, %v2439
    %v2441 = vlaneseq
    %v2442 = vshrl.u32 %v2441, 7
    %v2443 = vsub.s32 7, %v2442
    %v2444 = vrot.slane %v759, %v2443
    %v2445 = vlaneseq
    %v2446 = vshrl.u32 %v2445, 7
    %v2447 = vsub.s32 7, %v2446
    %v2448 = vrot.slane %v764, %v2447
    %v2449 = vlaneseq
    %v2450 = vshrl.u32 %v2449, 7
    %v2451 = vsub.s32 7, %v2450
    %v2452 = vrot.slane %v769, %v2451
    %v2453 = vmul.f32 %v2391, %v2424
    %v2454 = vmul.f32 %v2395, %v2428
    %v2455 = vmul.f32 %v2399, %v2432
    %v2456 = vmul.f32 %v2403, %v2436
    %v2457 = vmul.f32 %v2407, %v2440
    %v2458 = vmul.f32 %v2411, %v2444
    %v2459 = vmul.f32 %v2415, %v2448
    %v2460 = vmul.f32 %v2419, %v2452
    %v2461 = vadd.f32 %v2381, %v2453
    %v2462 = vadd.f32 %v2382, %v2454
    %v2463 = vadd.f32 %v2383, %v2455
    %v2464 = vadd.f32 %v2384, %v2456
    %v2465 = vadd.f32 %v2385, %v2457
    %v2466 = vadd.f32 %v2386, %v2458
    %v2467 = vadd.f32 %v2387, %v2459
    %v2468 = vadd.f32 %v2388, %v2460
    %v2469 = vld [vmem:[#allocation10] sm:$0xff]
    %v2470 = vld [vmem:[#allocation10 + $0x8] sm:$0xff]
    %v2471 = vld [vmem:[#allocation10 + $0x10] sm:$0xff]
    %v2472 = vld [vmem:[#allocation10 + $0x18] sm:$0xff]
    %v2473 = vld [vmem:[%s8] sm:$0x1]
    %v2475 = vlaneseq
    %v2476 = vshrl.u32 %v2475, 7
    %v2477 = vsub.s32 0, %v2476
    %v2478 = vrot.slane %v2473, %v2477
    %2488 = vrot.lane.b32.xlu0 %v2461, 120
    %v2489 = vpop.permute.xlu0 %2488
    %2490 = vrot.lane.b32.xlu0 %v2462, 120
    %v2491 = vpop.permute.xlu0 %2490
    %2492 = vrot.lane.b32.xlu0 %v2463, 120
    %v2493 = vpop.permute.xlu0 %2492
    %2494 = vrot.lane.b32.xlu0 %v2464, 120
    %v2495 = vpop.permute.xlu0 %2494
    %2496 = vrot.lane.b32.xlu0 %v2465, 120
    %v2497 = vpop.permute.xlu0 %2496
    %2498 = vrot.lane.b32.xlu0 %v2466, 120
    %v2499 = vpop.permute.xlu0 %2498
    %2500 = vrot.lane.b32.xlu0 %v2467, 120
    %v2501 = vpop.permute.xlu0 %2500
    %2502 = vrot.lane.b32.xlu0 %v2468, 120
    %v2503 = vpop.permute.xlu0 %2502
    %v2504 = vsel %vm128, %v2489, 0
    %v2506 = vsel %vm128, %v2491, 0
    %v2508 = vsel %vm128, %v2493, 0
    %v2510 = vsel %vm128, %v2495, 0
    %v2512 = vsel %vm128, %v2497, 0
    %v2514 = vsel %vm128, %v2499, 0
    %v2516 = vsel %vm128, %v2501, 0
    %v2518 = vsel %vm128, %v2503, 0
    %2520 = vmatprep.subr.mxu0 0.0
    %2521 = vmatpush1.msra.mxu0 %v2469
    %2522 = vmatprep.subr.mxu0 0.0
    %2523 = vmatpush1.msra.mxu0 %v2470
    %2524 = vmatprep.subr.mxu0 0.0
    %2525 = vmatpush1.msra.mxu0 %v2471
    %2526 = vmatprep.subr.mxu0 0.0
    %2527 = vmatpush1.msra.mxu0 %v2472
    %2528 = vmatprep.subr.mxu0 0.0
    %2529 = vmatpush1.msra.mxu0 0.0
    %2530 = vmatprep.subr.mxu0 0.0
    %2531 = vmatpush1.msra.mxu0 0.0
    %2532 = vmatprep.subr.mxu0 0.0
    %2533 = vmatpush1.msra.mxu0 0.0
    %2534 = vmatprep.subr.mxu0 0.0
    %2535 = vmatpush1.msra.mxu0 0.0
    %2536 = vmatprep.subr.mxu0 0.0
    %2537 = vmatpush1.msra.mxu0 0.0
    %2538 = vmatprep.subr.mxu0 0.0
    %2539 = vmatpush1.msra.mxu0 0.0
    %2540 = vmatprep.subr.mxu0 0.0
    %2541 = vmatpush1.msra.mxu0 0.0
    %2542 = vmatprep.subr.mxu0 0.0
    %2543 = vmatpush1.msra.mxu0 0.0
    %2544 = vmatprep.subr.mxu0 0.0
    %2545 = vmatpush1.msra.mxu0 0.0
    %2546 = vmatprep.subr.mxu0 0.0
    %2547 = vmatpush1.msra.mxu0 0.0
    %2548 = vmatprep.subr.mxu0 0.0
    %2549 = vmatpush1.msra.mxu0 0.0
    %2550 = vmatprep.subr.mxu0 0.0
    %2551 = vmatpush1.msra.mxu0 0.0
    %2552 = vmatprep.subr.mxu0 0.0
    %2553 = vmatpush1.msra.mxu0 0.0
    %2554 = vmatprep.subr.mxu0 0.0
    %2555 = vmatpush1.msra.mxu0 0.0
    %2556 = vmatprep.subr.mxu0 0.0
    %2557 = vmatpush1.msra.mxu0 0.0
    %2558 = vmatprep.subr.mxu0 0.0
    %2559 = vmatpush1.msra.mxu0 0.0
    %2560 = vmatprep.subr.mxu0 0.0
    %2561 = vmatpush1.msra.mxu0 0.0
    %2562 = vmatprep.subr.mxu0 0.0
    %2563 = vmatpush1.msra.mxu0 0.0
    %2564 = vmatprep.subr.mxu0 0.0
    %2565 = vmatpush1.msra.mxu0 0.0
    %2566 = vmatprep.subr.mxu0 0.0
    %2567 = vmatpush1.msra.mxu0 0.0
    %2568 = vmatprep.subr.mxu0 0.0
    %2569 = vmatpush1.msra.mxu0 0.0
    %2570 = vmatprep.subr.mxu0 0.0
    %2571 = vmatpush1.msra.mxu0 0.0
    %2572 = vmatprep.subr.mxu0 0.0
    %2573 = vmatpush1.msra.mxu0 0.0
    %2574 = vmatprep.subr.mxu0 0.0
    %2575 = vmatpush1.msra.mxu0 0.0
    %2576 = vmatprep.subr.mxu0 0.0
    %2577 = vmatpush1.msra.mxu0 0.0
    %2578 = vmatprep.subr.mxu0 0.0
    %2579 = vmatpush1.msra.mxu0 0.0
    %2580 = vmatprep.subr.mxu0 0.0
    %2581 = vmatpush1.msra.mxu0 0.0
    %2582 = vmatprep.subr.mxu0 0.0
    %2583 = vmatpush1.msra.mxu0 0.0
    %2584 = vmatprep.mubr.f32.mxu0 0.0
    %2585 = vmatmul.mubr.f32.gmra.mrb[0].mxu0 %v2504
    %v2586 = vpop.f32.mrb[0].mxu0
    %v2587 = vadd.f32 %v2478, %v2586
    %v2588 = vpop.f32.mrb[0].mxu0
    %2589 = vmatprep.mubr.f32.mxu0 0.0
    %2590 = vmatmul.mubr.f32.gmra.mrb[0].mxu0 %v2506
    %v2591 = vpop.f32.mrb[0].mxu0
    %v2592 = vadd.f32 %v2478, %v2591
    %v2593 = vpop.f32.mrb[0].mxu0
    %2594 = vmatprep.mubr.f32.mxu0 0.0
    %2595 = vmatmul.mubr.f32.gmra.mrb[0].mxu0 %v2508
    %v2596 = vpop.f32.mrb[0].mxu0
    %v2597 = vadd.f32 %v2478, %v2596
    %v2598 = vpop.f32.mrb[0].mxu0
    %2599 = vmatprep.mubr.f32.mxu0 0.0
    %2600 = vmatmul.mubr.f32.gmra.mrb[0].mxu0 %v2510
    %v2601 = vpop.f32.mrb[0].mxu0
    %v2602 = vadd.f32 %v2478, %v2601
    %v2603 = vpop.f32.mrb[0].mxu0
    %2604 = vmatprep.mubr.f32.mxu0 0.0
    %2605 = vmatmul.mubr.f32.gmra.mrb[0].mxu0 %v2512
    %v2606 = vpop.f32.mrb[0].mxu0
    %v2607 = vadd.f32 %v2478, %v2606
    %v2608 = vpop.f32.mrb[0].mxu0
    %2609 = vmatprep.mubr.f32.mxu0 0.0
    %2610 = vmatmul.mubr.f32.gmra.mrb[0].mxu0 %v2514
    %v2611 = vpop.f32.mrb[0].mxu0
    %v2612 = vadd.f32 %v2478, %v2611
    %v2613 = vpop.f32.mrb[0].mxu0
    %2614 = vmatprep.mubr.f32.mxu0 0.0
    %2615 = vmatmul.mubr.f32.gmra.mrb[0].mxu0 %v2516
    %v2616 = vpop.f32.mrb[0].mxu0
    %v2617 = vadd.f32 %v2478, %v2616
    %v2618 = vpop.f32.mrb[0].mxu0
    %2619 = vmatprep.mubr.f32.mxu0 0.0
    %2620 = vmatmul.mubr.f32.gmra.mrb[0].mxu0 %v2518
    %v2621 = vpop.f32.mrb[0].mxu0
    %v2622 = vadd.f32 %v2478, %v2621
    %v2623 = vpop.f32.mrb[0].mxu0
    %2624 = vdwg.mxu0
    %v2625 = vadd.f32 %v2587, %v104
    %v2626 = vadd.f32 %v2592, %v105
    %v2627 = vadd.f32 %v2597, %v106
    %v2628 = vadd.f32 %v2602, %v107
    %v2629 = vadd.f32 %v2607, %v108
    %v2630 = vadd.f32 %v2612, %v109
    %v2631 = vadd.f32 %v2617, %v110
    %v2632 = vadd.f32 %v2622, %v111
    %2633 = vst.msk [vmem:[#allocation11] sm:$0xff] %vm128, %v2625
    %2634 = vst.msk [vmem:[#allocation11 + $0x8] sm:$0xff] %vm128, %v2626
    %2635 = vst.msk [vmem:[#allocation11 + $0x10] sm:$0xff] %vm128, %v2627
    %2636 = vst.msk [vmem:[#allocation11 + $0x18] sm:$0xff] %vm128, %v2628
    %2637 = vst.msk [vmem:[#allocation11 + $0x20] sm:$0xff] %vm128, %v2629
    %2638 = vst.msk [vmem:[#allocation11 + $0x28] sm:$0xff] %vm128, %v2630
    %2639 = vst.msk [vmem:[#allocation11 + $0x30] sm:$0xff] %vm128, %v2631
    %2640 = vst.msk [vmem:[#allocation11 + $0x38] sm:$0xff] %vm128, %v2632
    %2641 = vst.msk [vmem:[#allocation12] sm:$0xff] %vm956, %v1821
    %2642 = vst.msk [vmem:[#allocation12 + $0x8] sm:$0xff] %vm956, %v1822
    %2643 = vst.msk [vmem:[#allocation12 + $0x10] sm:$0xff] %vm956, %v1823
    %2644 = vst.msk [vmem:[#allocation12 + $0x18] sm:$0xff] %vm956, %v1824
    %2645 = vst.msk [vmem:[#allocation12 + $0x20] sm:$0xff] %vm956, %v1825
    %2646 = vst.msk [vmem:[#allocation12 + $0x28] sm:$0xff] %vm956, %v1826
    %2647 = vst.msk [vmem:[#allocation12 + $0x30] sm:$0xff] %vm956, %v1827
    %2648 = vst.msk [vmem:[#allocation12 + $0x38] sm:$0xff] %vm956, %v1828
    // Predicated region
    $region58: #{tpu_custom_call.1} parent=1 // pred_check
      _
    $region59: #{tpu_custom_call.1} parent=1 // pred_check_branch
      %2650 = sbr.rel (0) target = $region61
    $region60: #{tpu_custom_call.1} parent=1 // pred_region
      %s2652 = ssub.s32 1024, 1024
      %2653 = vsyncadd [#allocation4], %s2652
      %s2654 = sshll.u32 [#allocation11], 4
      %s2655 = int_to_ptr.vmem [resolvable:$true] %s2654
      %2660 = dma.vmem_to_hbm [thread:$0]  %s2655, 1024, %s9, [#allocation4], 128, 128, 8
    $region61: #{tpu_custom_call.1} parent=1 // pred_fallthru
      _
    // Predicated region
    $region62: #{tpu_custom_call.1} parent=1 // pred_check
      _
    $region63: #{tpu_custom_call.1} parent=1 // pred_check_branch
      %2662 = sbr.rel (0) target = $region65
    $region64: #{tpu_custom_call.1} parent=1 // pred_region
      %s2664 = ssub.s32 1024, 1024
      %2665 = vsyncadd [#allocation13], %s2664
      %s2666 = sshll.u32 [#allocation12], 4
      %s2667 = int_to_ptr.vmem [resolvable:$true] %s2666
      %2672 = dma.vmem_to_hbm [thread:$0]  %s2667, 1024, %s10, [#allocation13], 128, 128, 8
    $region65: #{tpu_custom_call.1} parent=1 // pred_fallthru
      _
    // Predicated region
    $region66: #{tpu_custom_call.1} parent=1 // pred_check
      _
    $region67: #{tpu_custom_call.1} parent=1 // pred_check_branch
      %2674 = sbr.rel (0) target = $region69
    $region68: #{tpu_custom_call.1} parent=1 // pred_region
      %2675 = dma.done [#allocation4], 1024
    $region69: #{tpu_custom_call.1} parent=1 // pred_fallthru
      _
    // Predicated region
    $region70: #{tpu_custom_call.1} parent=1 // pred_check
      _
    $region71: #{tpu_custom_call.1} parent=1 // pred_check_branch
      %2677 = sbr.rel (0) target = $region73
    $region72: #{tpu_custom_call.1} parent=1 // pred_region
      %2678 = dma.done [#allocation13], 1024
    $region73: #{tpu_custom_call.1} parent=1 // pred_fallthru
      _
    %2679 = vsyncpa [#allocation3], 1
    %2680 = vsyncpa [#allocation6], 1
    %2681 = vsyncpa [#allocation9], 1
    %2682 = vsyncpa [#allocation4], 1
    %2683 = vsyncpa [#allocation13], 1

</llo_original>
